<compile_context>
chip_gen: v5e
topology: v5e:2x2
jax: 0.10.0
libtpu: 0.0.40
codegen_flags: <defaults>
</compile_context>

<pallas_src>
import functools

import jax
import jax.numpy as jnp
from jax.experimental import pallas as pl
from jax.experimental.pallas import tpu as pltpu


# ----------------------------------------------------------------------------
# helpers
# ----------------------------------------------------------------------------
def _pick_tile(dim, candidates):
    """Largest candidate that evenly divides `dim`, else the full dim."""
    for c in candidates:
        if dim >= c and dim % c == 0:
            return c
    return dim


def _pick_chunk(T):
    for c in (32, 16, 8, 4, 2, 1):
        if T % c == 0:
            return c
    return 1


# ----------------------------------------------------------------------------
# Tiled linear kernel:  y = x @ w + b     (used for the hoisted input proj.)
# ----------------------------------------------------------------------------
def _linear_kernel(x_ref, w_ref, b_ref, o_ref):
    o_ref[...] = (jnp.dot(x_ref[...], w_ref[...],
                          preferred_element_type=jnp.float32)
                  + b_ref[...]).astype(o_ref.dtype)


def linear(x, w_t, b):
    """x: (M, K), w_t: (K, N), b: (1, N) -> (M, N) f32, tiled over (M, N)."""
    M, K = x.shape
    N = w_t.shape[1]
    tm = _pick_tile(M, (256, 128))
    tn = _pick_tile(N, (512, 256, 128))
    return pl.pallas_call(
        _linear_kernel,
        out_shape=jax.ShapeDtypeStruct((M, N), jnp.float32),
        grid_spec=pltpu.PrefetchScalarGridSpec(
            num_scalar_prefetch=0,
            grid=(M // tm, N // tn),
            in_specs=[
                pl.BlockSpec((tm, K), lambda i, j: (i, 0)),
                pl.BlockSpec((K, tn), lambda i, j: (0, j)),
                pl.BlockSpec((1, tn), lambda i, j: (0, j)),
            ],
            out_specs=pl.BlockSpec((tm, tn), lambda i, j: (i, j)),
        ),
        compiler_params=pltpu.CompilerParams(
            dimension_semantics=("parallel", "parallel")),
    )(x, w_t, b)


# ----------------------------------------------------------------------------
# LSTM recurrence kernel: grid over time CHUNKS, h/c carried in VMEM scratch.
# Consumes pre-projected gates_x (B, T, 4H); computes only h @ W_hh^T in-loop.
# ----------------------------------------------------------------------------
def _lstm_chunk_kernel(gx_ref, whh_ref, h0_ref, c0_ref, hid_ref,
                       h_sc, c_sc, *, t_chunk, hidden_size):
    t = pl.program_id(0)

    @pl.when(t == 0)
    def _():
        h_sc[...] = h0_ref[...].astype(jnp.float32)
        c_sc[...] = c0_ref[...].astype(jnp.float32)

    h = h_sc[...]                       # (B, H)
    c = c_sc[...]                       # (B, H)
    whh = whh_ref[...]                  # (H, 4H)
    H = hidden_size

    # Static unrolled chunk loop (small fixed trip count); all indexing static.
    for j in range(t_chunk):
        gates = gx_ref[:, j, :] + jnp.dot(
            h, whh, preferred_element_type=jnp.float32)          # (B, 4H)
        i_g = jax.nn.sigmoid(gates[:, 0 * H:1 * H])
        f_g = jax.nn.sigmoid(gates[:, 1 * H:2 * H])
        g_g = jnp.tanh(gates[:, 2 * H:3 * H])
        o_g = jax.nn.sigmoid(gates[:, 3 * H:4 * H])
        c = f_g * c + i_g * g_g
        h = o_g * jnp.tanh(c)
        hid_ref[:, j, :] = h.astype(hid_ref.dtype)

    h_sc[...] = h
    c_sc[...] = c


def lstm_recurrence(gates_x, w_hh, h0, c0, *, t_chunk):
    """gates_x: (B, T, 4H) pre-projected input gates.  Returns (B, T, H)."""
    B, T, G = gates_x.shape
    H = h0.shape[1]
    whh_t = jnp.transpose(w_hh)                       # (H, 4H)

    kernel = functools.partial(_lstm_chunk_kernel,
                               t_chunk=t_chunk, hidden_size=H)
    return pl.pallas_call(
        kernel,
        out_shape=jax.ShapeDtypeStruct((B, T, H), jnp.float32),
        grid_spec=pltpu.PrefetchScalarGridSpec(
            num_scalar_prefetch=0,
            grid=(T // t_chunk,),
            in_specs=[
                pl.BlockSpec((B, t_chunk, G), lambda t: (0, t, 0)),  # gates_x
                pl.BlockSpec((H, G), lambda t: (0, 0)),              # W_hh^T
                pl.BlockSpec((B, H), lambda t: (0, 0)),              # h0
                pl.BlockSpec((B, H), lambda t: (0, 0)),              # c0
            ],
            out_specs=pl.BlockSpec((B, t_chunk, H), lambda t: (0, t, 0)),
            scratch_shapes=[
                pltpu.VMEM((B, H), jnp.float32),                     # h carry
                pltpu.VMEM((B, H), jnp.float32),                     # c carry
            ],
        ),
        compiler_params=pltpu.CompilerParams(
            dimension_semantics=("arbitrary",)),      # sequential in time
    )(gates_x, whh_t, h0, c0)


# ----------------------------------------------------------------------------
# Decoder kernel: log_softmax(h @ W_dec^T + b_dec), tiled over rows.
# Full vocab kept in one block so the row-wise logsumexp stays fused.
# TODO(synk): for very large vocab sizes, tile V with a two-pass logsumexp.
# ----------------------------------------------------------------------------
def _decode_kernel(h_ref, w_ref, b_ref, o_ref):
    logits = (jnp.dot(h_ref[...], w_ref[...],
                      preferred_element_type=jnp.float32)
              + b_ref[...])                                        # (tm, V)
    m = jnp.max(logits, axis=-1, keepdims=True)
    shifted = logits - m
    lse = jnp.log(jnp.sum(jnp.exp(shifted), axis=-1, keepdims=True))
    o_ref[...] = (shifted - lse).astype(o_ref.dtype)


def decode(h_flat, dec_w, dec_b):
    """h_flat: (N, H); dec_w: (V, H); dec_b: (V,).  Returns (N, V) log-probs."""
    N, H = h_flat.shape
    V = dec_w.shape[0]
    w_t = jnp.transpose(dec_w)                        # (H, V)
    b = dec_b.reshape(1, V)
    tm = _pick_tile(N, (256, 128))
    return pl.pallas_call(
        _decode_kernel,
        out_shape=jax.ShapeDtypeStruct((N, V), jnp.float32),
        grid_spec=pltpu.PrefetchScalarGridSpec(
            num_scalar_prefetch=0,
            grid=(N // tm,),
            in_specs=[
                pl.BlockSpec((tm, H), lambda i: (i, 0)),
                pl.BlockSpec((H, V), lambda i: (0, 0)),   # weight resident
                pl.BlockSpec((1, V), lambda i: (0, 0)),
            ],
            out_specs=pl.BlockSpec((tm, V), lambda i: (i, 0)),
        ),
        compiler_params=pltpu.CompilerParams(
            dimension_semantics=("parallel",)),
    )(h_flat, w_t, b)


# ----------------------------------------------------------------------------
# Full model forward: LSTMModel.forward(d, hidden) -> (log_probs, hiddens)
# ----------------------------------------------------------------------------
def lstm_model_forward(params, d, hidden):
    """d: (B, T) int32 token ids; hidden: (h0, c0) each (B, H).
    Returns (decoded (B, T, V) log-probs, hiddens (B, T, H))."""
    embed_w = params["embed_weight"]                  # (V, E)
    B, T = d.shape
    E = embed_w.shape[1]
    H = params["w_hh"].shape[1]
    V = params["dec_w"].shape[0]

    # Embedding lookup (gather) stays in plain JAX glue.
    d_embedded = jnp.take(embed_w, d, axis=0)         # (B, T, E)

    # Hoisted input projection: one big batched matmul on the MXU.
    wih_t = jnp.transpose(params["w_ih"])             # (E, 4H)
    bias = (params["b_ih"] + params["b_hh"]).reshape(1, 4 * H).astype(jnp.float32)
    gates_x = linear(d_embedded.reshape(B * T, E), wih_t, bias)   # (B*T, 4H)
    gates_x = gates_x.reshape(B, T, 4 * H)            # free row-major reshape

    h0, c0 = hidden
    t_chunk = _pick_chunk(T)
    hiddens = lstm_recurrence(gates_x, params["w_hh"], h0, c0,
                              t_chunk=t_chunk)        # (B, T, H) directly

    decoded = decode(hiddens.reshape(B * T, H),
                     params["dec_w"], params["dec_b"])            # (B*T, V)
    return decoded.reshape(B, T, V), hiddens


# ----------------------------------------------------------------------------
# Pure-JAX reference (for correctness check)
# ----------------------------------------------------------------------------
def reference_forward(params, d, hidden):
    embed_w = params["embed_weight"]
    x = jnp.take(embed_w, d, axis=0)                  # (B, T, E)
    h0, c0 = hidden
    H = h0.shape[1]

    def step(carry, x_t):
        h, c = carry
        gates = (x_t @ params["w_ih"].T + params["b_ih"]
                 + h @ params["w_hh"].T + params["b_hh"])
        i_g = jax.nn.sigmoid(gates[:, 0 * H:1 * H])
        f_g = jax.nn.sigmoid(gates[:, 1 * H:2 * H])
        g_g = jnp.tanh(gates[:, 2 * H:3 * H])
        o_g = jax.nn.sigmoid(gates[:, 3 * H:4 * H])
        c = f_g * c + i_g * g_g
        h = o_g * jnp.tanh(c)
        return (h, c), h

    _, hs = jax.lax.scan(step, (h0, c0), jnp.transpose(x, (1, 0, 2)))
    hiddens = jnp.transpose(hs, (1, 0, 2))            # (B, T, H)
    B, T, _ = hiddens.shape
    logits = hiddens.reshape(B * T, H) @ params["dec_w"].T + params["dec_b"]
    decoded = jax.nn.log_softmax(logits, axis=-1)
    return decoded.reshape(B, T, -1), hiddens


if __name__ == "__main__":
    B, T = 2, 8
    E = 32              # embedding_size
    H = 32              # hidden_size
    V = 64              # vocab_size

    key = jax.random.PRNGKey(0)
    ks = jax.random.split(key, 7)
    stdv = 1.0 / (H ** 0.5)
    params = {
        "embed_weight": jax.random.uniform(ks[0], (V, E), jnp.float32, -0.1, 0.1),
        "w_ih": jax.random.uniform(ks[1], (4 * H, E), jnp.float32, -stdv, stdv),
        "w_hh": jax.random.uniform(ks[2], (4 * H, H), jnp.float32, -stdv, stdv),
        "b_ih": jax.random.uniform(ks[3], (4 * H,), jnp.float32, -stdv, stdv),
        "b_hh": jax.random.uniform(ks[4], (4 * H,), jnp.float32, -stdv, stdv),
        "dec_w": jax.random.uniform(ks[5], (V, H), jnp.float32, -0.1, 0.1),
        "dec_b": jnp.zeros((V,), jnp.float32),        # decoder.bias.fill_(0)
    }

    d = jax.random.randint(ks[6], (B, T), 0, V, dtype=jnp.int32)
    hidden = (jnp.zeros((B, H), jnp.float32), jnp.zeros((B, H), jnp.float32))

    decoded, hiddens = jax.jit(lstm_model_forward)(params, d, hidden)
    decoded = jax.block_until_ready(decoded)
    hiddens = jax.block_until_ready(hiddens)

    ref_decoded, ref_hiddens = reference_forward(params, d, hidden)
    assert decoded.shape == (B, T, V) and hiddens.shape == (B, T, H)
    assert jnp.allclose(hiddens, ref_hiddens, atol=1e-4, rtol=1e-4)
    assert jnp.allclose(decoded, ref_decoded, atol=1e-4, rtol=1e-4)

    print("KERNEL_OK")
</pallas_src>

<mosaic_0001>
module attributes {stable_mosaic.version = 11 : i64} {
  func.func @_lstm_chunk_kernel(%arg0: i32, %arg1: memref<2x8x128xf32, #tpu.memory_space<vmem>>, %arg2: memref<32x128xf32, #tpu.memory_space<vmem>>, %arg3: memref<2x32xf32, #tpu.memory_space<vmem>>, %arg4: memref<2x32xf32, #tpu.memory_space<vmem>>, %arg5: memref<2x8x32xf32, #tpu.memory_space<vmem>>, %arg6: memref<2x32xf32, #tpu.memory_space<vmem>>, %arg7: memref<2x32xf32, #tpu.memory_space<vmem>>) attributes {dimension_semantics = [#tpu.dimension_semantics<arbitrary>], iteration_bounds = array<i64: 1>, scalar_prefetch = 0 : i64, scratch_operands = 2 : i64, tpu.core_type = #tpu.core_type<tc>, window_params = [{transform_indices = @transform_0, window_bounds = array<i64: 2, 8, 128>}, {pipeline_mode = #tpu.pipeline_mode<synchronous>, transform_indices = @transform_1, window_bounds = array<i64: 32, 128>}, {pipeline_mode = #tpu.pipeline_mode<synchronous>, transform_indices = @transform_2, window_bounds = array<i64: 2, 32>}, {pipeline_mode = #tpu.pipeline_mode<synchronous>, transform_indices = @transform_3, window_bounds = array<i64: 2, 32>}, {transform_indices = @transform_4, window_bounds = array<i64: 2, 8, 32>}]} {
    %c0_i32 = arith.constant 0 : i32
    %0 = arith.cmpi eq, %arg0, %c0_i32 : i32
    %1 = arith.extui %0 : i1 to i32
    %c0_i32_0 = arith.constant 0 : i32
    %2 = arith.cmpi ne, %1, %c0_i32_0 : i32
    scf.if %2 {
      %c0_82 = arith.constant 0 : index
      %c0_83 = arith.constant 0 : index
      %264 = vector.load %arg3[%c0_82, %c0_83] : memref<2x32xf32, #tpu.memory_space<vmem>>, vector<2x32xf32>
      %c0_84 = arith.constant 0 : index
      %c0_85 = arith.constant 0 : index
      %265 = vector.load %arg6[%c0_84, %c0_85] : memref<2x32xf32, #tpu.memory_space<vmem>>, vector<2x32xf32>
      tpu.vector_store %arg6[%c0_84, %c0_85], %264 {strides = array<i32>} : memref<2x32xf32, #tpu.memory_space<vmem>>, vector<2x32xf32>,
      %c0_86 = arith.constant 0 : index
      %c0_87 = arith.constant 0 : index
      %266 = vector.load %arg4[%c0_86, %c0_87] : memref<2x32xf32, #tpu.memory_space<vmem>>, vector<2x32xf32>
      %c0_88 = arith.constant 0 : index
      %c0_89 = arith.constant 0 : index
      %267 = vector.load %arg7[%c0_88, %c0_89] : memref<2x32xf32, #tpu.memory_space<vmem>>, vector<2x32xf32>
      tpu.vector_store %arg7[%c0_88, %c0_89], %266 {strides = array<i32>} : memref<2x32xf32, #tpu.memory_space<vmem>>, vector<2x32xf32>,
    } else {
    }
    %c0 = arith.constant 0 : index
    %c0_1 = arith.constant 0 : index
    %3 = vector.load %arg6[%c0, %c0_1] : memref<2x32xf32, #tpu.memory_space<vmem>>, vector<2x32xf32>
    %c0_2 = arith.constant 0 : index
    %c0_3 = arith.constant 0 : index
    %4 = vector.load %arg7[%c0_2, %c0_3] : memref<2x32xf32, #tpu.memory_space<vmem>>, vector<2x32xf32>
    %c0_4 = arith.constant 0 : index
    %c0_5 = arith.constant 0 : index
    %5 = vector.load %arg2[%c0_4, %c0_5] : memref<32x128xf32, #tpu.memory_space<vmem>>, vector<32x128xf32>
    %c0_6 = arith.constant 0 : index
    %c0_7 = arith.constant 0 : index
    %c0_8 = arith.constant 0 : index
    %6 = vector.load %arg1[%c0_6, %c0_7, %c0_8] : memref<2x8x128xf32, #tpu.memory_space<vmem>>, vector<2x1x128xf32>
    %7 = vector.shape_cast %6 : vector<2x1x128xf32> to vector<2x128xf32>
    %cst = arith.constant dense<0.000000e+00> : vector<2x128xf32>
    %8 = tpu.matmul %3, %5, %cst {dimension_numbers = #tpu.dot_dimension_numbers<[1], [0], [0], [1], [0, 0, 1, 1], [], []>} : vector<2x32xf32>, vector<32x128xf32>, vector<2x128xf32> -> vector<2x128xf32>
    %9 = arith.addf %7, %8 : vector<2x128xf32>
    %10 = vector.extract_strided_slice %9 {offsets = [0, 0], sizes = [2, 32], strides = [1, 1]} : vector<2x128xf32> to vector<2x32xf32>
    %11 = arith.negf %10 : vector<2x32xf32>
    %12 = math.exp %11 : vector<2x32xf32>
    %cst_9 = arith.constant 1.000000e+00 : f32
    %13 = vector.broadcast %cst_9 : f32 to vector<2x32xf32>
    %14 = arith.addf %13, %12 : vector<2x32xf32>
    %15 = arith.divf %13, %14 : vector<2x32xf32>
    %16 = vector.extract_strided_slice %9 {offsets = [0, 32], sizes = [2, 32], strides = [1, 1]} : vector<2x128xf32> to vector<2x32xf32>
    %17 = arith.negf %16 : vector<2x32xf32>
    %18 = math.exp %17 : vector<2x32xf32>
    %cst_10 = arith.constant 1.000000e+00 : f32
    %19 = vector.broadcast %cst_10 : f32 to vector<2x32xf32>
    %20 = arith.addf %19, %18 : vector<2x32xf32>
    %21 = arith.divf %19, %20 : vector<2x32xf32>
    %22 = vector.extract_strided_slice %9 {offsets = [0, 64], sizes = [2, 32], strides = [1, 1]} : vector<2x128xf32> to vector<2x32xf32>
    %23 = math.tanh %22 : vector<2x32xf32>
    %24 = vector.extract_strided_slice %9 {offsets = [0, 96], sizes = [2, 32], strides = [1, 1]} : vector<2x128xf32> to vector<2x32xf32>
    %25 = arith.negf %24 : vector<2x32xf32>
    %26 = math.exp %25 : vector<2x32xf32>
    %cst_11 = arith.constant 1.000000e+00 : f32
    %27 = vector.broadcast %cst_11 : f32 to vector<2x32xf32>
    %28 = arith.addf %27, %26 : vector<2x32xf32>
    %29 = arith.divf %27, %28 : vector<2x32xf32>
    %30 = arith.mulf %21, %4 : vector<2x32xf32>
    %31 = arith.mulf %15, %23 : vector<2x32xf32>
    %32 = arith.addf %30, %31 : vector<2x32xf32>
    %33 = math.tanh %32 : vector<2x32xf32>
    %34 = arith.mulf %29, %33 : vector<2x32xf32>
    %c0_12 = arith.constant 0 : index
    %c0_13 = arith.constant 0 : index
    %c0_14 = arith.constant 0 : index
    %35 = vector.load %arg5[%c0_12, %c0_13, %c0_14] : memref<2x8x32xf32, #tpu.memory_space<vmem>>, vector<2x1x32xf32>
    %36 = vector.shape_cast %35 : vector<2x1x32xf32> to vector<2x32xf32>
    %37 = vector.shape_cast %34 : vector<2x32xf32> to vector<2x1x32xf32>
    tpu.vector_store %arg5[%c0_12, %c0_13, %c0_14], %37 {strides = array<i32>} : memref<2x8x32xf32, #tpu.memory_space<vmem>>, vector<2x1x32xf32>,
    %c0_15 = arith.constant 0 : index
    %c1 = arith.constant 1 : index
    %c0_16 = arith.constant 0 : index
    %38 = vector.load %arg1[%c0_15, %c1, %c0_16] : memref<2x8x128xf32, #tpu.memory_space<vmem>>, vector<2x1x128xf32>
    %39 = vector.shape_cast %38 : vector<2x1x128xf32> to vector<2x128xf32>
    %cst_17 = arith.constant dense<0.000000e+00> : vector<2x128xf32>
    %40 = tpu.matmul %34, %5, %cst_17 {dimension_numbers = #tpu.dot_dimension_numbers<[1], [0], [0], [1], [0, 0, 1, 1], [], []>} : vector<2x32xf32>, vector<32x128xf32>, vector<2x128xf32> -> vector<2x128xf32>
    %41 = arith.addf %39, %40 : vector<2x128xf32>
    %42 = vector.extract_strided_slice %41 {offsets = [0, 0], sizes = [2, 32], strides = [1, 1]} : vector<2x128xf32> to vector<2x32xf32>
    %43 = arith.negf %42 : vector<2x32xf32>
    %44 = math.exp %43 : vector<2x32xf32>
    %cst_18 = arith.constant 1.000000e+00 : f32
    %45 = vector.broadcast %cst_18 : f32 to vector<2x32xf32>
    %46 = arith.addf %45, %44 : vector<2x32xf32>
    %47 = arith.divf %45, %46 : vector<2x32xf32>
    %48 = vector.extract_strided_slice %41 {offsets = [0, 32], sizes = [2, 32], strides = [1, 1]} : vector<2x128xf32> to vector<2x32xf32>
    %49 = arith.negf %48 : vector<2x32xf32>
    %50 = math.exp %49 : vector<2x32xf32>
    %cst_19 = arith.constant 1.000000e+00 : f32
    %51 = vector.broadcast %cst_19 : f32 to vector<2x32xf32>
    %52 = arith.addf %51, %50 : vector<2x32xf32>
    %53 = arith.divf %51, %52 : vector<2x32xf32>
    %54 = vector.extract_strided_slice %41 {offsets = [0, 64], sizes = [2, 32], strides = [1, 1]} : vector<2x128xf32> to vector<2x32xf32>
    %55 = math.tanh %54 : vector<2x32xf32>
    %56 = vector.extract_strided_slice %41 {offsets = [0, 96], sizes = [2, 32], strides = [1, 1]} : vector<2x128xf32> to vector<2x32xf32>
    %57 = arith.negf %56 : vector<2x32xf32>
    %58 = math.exp %57 : vector<2x32xf32>
    %cst_20 = arith.constant 1.000000e+00 : f32
    %59 = vector.broadcast %cst_20 : f32 to vector<2x32xf32>
    %60 = arith.addf %59, %58 : vector<2x32xf32>
    %61 = arith.divf %59, %60 : vector<2x32xf32>
    %62 = arith.mulf %53, %32 : vector<2x32xf32>
    %63 = arith.mulf %47, %55 : vector<2x32xf32>
    %64 = arith.addf %62, %63 : vector<2x32xf32>
    %65 = math.tanh %64 : vector<2x32xf32>
    %66 = arith.mulf %61, %65 : vector<2x32xf32>
    %c0_21 = arith.constant 0 : index
    %c1_22 = arith.constant 1 : index
    %c0_23 = arith.constant 0 : index
    %67 = vector.load %arg5[%c0_21, %c1_22, %c0_23] : memref<2x8x32xf32, #tpu.memory_space<vmem>>, vector<2x1x32xf32>
    %68 = vector.shape_cast %67 : vector<2x1x32xf32> to vector<2x32xf32>
    %69 = vector.shape_cast %66 : vector<2x32xf32> to vector<2x1x32xf32>
    tpu.vector_store %arg5[%c0_21, %c1_22, %c0_23], %69 {strides = array<i32>} : memref<2x8x32xf32, #tpu.memory_space<vmem>>, vector<2x1x32xf32>,
    %c0_24 = arith.constant 0 : index
    %c2 = arith.constant 2 : index
    %c0_25 = arith.constant 0 : index
    %70 = vector.load %arg1[%c0_24, %c2, %c0_25] : memref<2x8x128xf32, #tpu.memory_space<vmem>>, vector<2x1x128xf32>
    %71 = vector.shape_cast %70 : vector<2x1x128xf32> to vector<2x128xf32>
    %cst_26 = arith.constant dense<0.000000e+00> : vector<2x128xf32>
    %72 = tpu.matmul %66, %5, %cst_26 {dimension_numbers = #tpu.dot_dimension_numbers<[1], [0], [0], [1], [0, 0, 1, 1], [], []>} : vector<2x32xf32>, vector<32x128xf32>, vector<2x128xf32> -> vector<2x128xf32>
    %73 = arith.addf %71, %72 : vector<2x128xf32>
    %74 = vector.extract_strided_slice %73 {offsets = [0, 0], sizes = [2, 32], strides = [1, 1]} : vector<2x128xf32> to vector<2x32xf32>
    %75 = arith.negf %74 : vector<2x32xf32>
    %76 = math.exp %75 : vector<2x32xf32>
    %cst_27 = arith.constant 1.000000e+00 : f32
    %77 = vector.broadcast %cst_27 : f32 to vector<2x32xf32>
    %78 = arith.addf %77, %76 : vector<2x32xf32>
    %79 = arith.divf %77, %78 : vector<2x32xf32>
    %80 = vector.extract_strided_slice %73 {offsets = [0, 32], sizes = [2, 32], strides = [1, 1]} : vector<2x128xf32> to vector<2x32xf32>
    %81 = arith.negf %80 : vector<2x32xf32>
    %82 = math.exp %81 : vector<2x32xf32>
    %cst_28 = arith.constant 1.000000e+00 : f32
    %83 = vector.broadcast %cst_28 : f32 to vector<2x32xf32>
    %84 = arith.addf %83, %82 : vector<2x32xf32>
    %85 = arith.divf %83, %84 : vector<2x32xf32>
    %86 = vector.extract_strided_slice %73 {offsets = [0, 64], sizes = [2, 32], strides = [1, 1]} : vector<2x128xf32> to vector<2x32xf32>
    %87 = math.tanh %86 : vector<2x32xf32>
    %88 = vector.extract_strided_slice %73 {offsets = [0, 96], sizes = [2, 32], strides = [1, 1]} : vector<2x128xf32> to vector<2x32xf32>
    %89 = arith.negf %88 : vector<2x32xf32>
    %90 = math.exp %89 : vector<2x32xf32>
    %cst_29 = arith.constant 1.000000e+00 : f32
    %91 = vector.broadcast %cst_29 : f32 to vector<2x32xf32>
    %92 = arith.addf %91, %90 : vector<2x32xf32>
    %93 = arith.divf %91, %92 : vector<2x32xf32>
    %94 = arith.mulf %85, %64 : vector<2x32xf32>
    %95 = arith.mulf %79, %87 : vector<2x32xf32>
    %96 = arith.addf %94, %95 : vector<2x32xf32>
    %97 = math.tanh %96 : vector<2x32xf32>
    %98 = arith.mulf %93, %97 : vector<2x32xf32>
    %c0_30 = arith.constant 0 : index
    %c2_31 = arith.constant 2 : index
    %c0_32 = arith.constant 0 : index
    %99 = vector.load %arg5[%c0_30, %c2_31, %c0_32] : memref<2x8x32xf32, #tpu.memory_space<vmem>>, vector<2x1x32xf32>
    %100 = vector.shape_cast %99 : vector<2x1x32xf32> to vector<2x32xf32>
    %101 = vector.shape_cast %98 : vector<2x32xf32> to vector<2x1x32xf32>
    tpu.vector_store %arg5[%c0_30, %c2_31, %c0_32], %101 {strides = array<i32>} : memref<2x8x32xf32, #tpu.memory_space<vmem>>, vector<2x1x32xf32>,
    %c0_33 = arith.constant 0 : index
    %c3 = arith.constant 3 : index
    %c0_34 = arith.constant 0 : index
    %102 = vector.load %arg1[%c0_33, %c3, %c0_34] : memref<2x8x128xf32, #tpu.memory_space<vmem>>, vector<2x1x128xf32>
    %103 = vector.shape_cast %102 : vector<2x1x128xf32> to vector<2x128xf32>
    %cst_35 = arith.constant dense<0.000000e+00> : vector<2x128xf32>
    %104 = tpu.matmul %98, %5, %cst_35 {dimension_numbers = #tpu.dot_dimension_numbers<[1], [0], [0], [1], [0, 0, 1, 1], [], []>} : vector<2x32xf32>, vector<32x128xf32>, vector<2x128xf32> -> vector<2x128xf32>
    %105 = arith.addf %103, %104 : vector<2x128xf32>
    %106 = vector.extract_strided_slice %105 {offsets = [0, 0], sizes = [2, 32], strides = [1, 1]} : vector<2x128xf32> to vector<2x32xf32>
    %107 = arith.negf %106 : vector<2x32xf32>
    %108 = math.exp %107 : vector<2x32xf32>
    %cst_36 = arith.constant 1.000000e+00 : f32
    %109 = vector.broadcast %cst_36 : f32 to vector<2x32xf32>
    %110 = arith.addf %109, %108 : vector<2x32xf32>
    %111 = arith.divf %109, %110 : vector<2x32xf32>
    %112 = vector.extract_strided_slice %105 {offsets = [0, 32], sizes = [2, 32], strides = [1, 1]} : vector<2x128xf32> to vector<2x32xf32>
    %113 = arith.negf %112 : vector<2x32xf32>
    %114 = math.exp %113 : vector<2x32xf32>
    %cst_37 = arith.constant 1.000000e+00 : f32
    %115 = vector.broadcast %cst_37 : f32 to vector<2x32xf32>
    %116 = arith.addf %115, %114 : vector<2x32xf32>
    %117 = arith.divf %115, %116 : vector<2x32xf32>
    %118 = vector.extract_strided_slice %105 {offsets = [0, 64], sizes = [2, 32], strides = [1, 1]} : vector<2x128xf32> to vector<2x32xf32>
    %119 = math.tanh %118 : vector<2x32xf32>
    %120 = vector.extract_strided_slice %105 {offsets = [0, 96], sizes = [2, 32], strides = [1, 1]} : vector<2x128xf32> to vector<2x32xf32>
    %121 = arith.negf %120 : vector<2x32xf32>
    %122 = math.exp %121 : vector<2x32xf32>
    %cst_38 = arith.constant 1.000000e+00 : f32
    %123 = vector.broadcast %cst_38 : f32 to vector<2x32xf32>
    %124 = arith.addf %123, %122 : vector<2x32xf32>
    %125 = arith.divf %123, %124 : vector<2x32xf32>
    %126 = arith.mulf %117, %96 : vector<2x32xf32>
    %127 = arith.mulf %111, %119 : vector<2x32xf32>
    %128 = arith.addf %126, %127 : vector<2x32xf32>
    %129 = math.tanh %128 : vector<2x32xf32>
    %130 = arith.mulf %125, %129 : vector<2x32xf32>
    %c0_39 = arith.constant 0 : index
    %c3_40 = arith.constant 3 : index
    %c0_41 = arith.constant 0 : index
    %131 = vector.load %arg5[%c0_39, %c3_40, %c0_41] : memref<2x8x32xf32, #tpu.memory_space<vmem>>, vector<2x1x32xf32>
    %132 = vector.shape_cast %131 : vector<2x1x32xf32> to vector<2x32xf32>
    %133 = vector.shape_cast %130 : vector<2x32xf32> to vector<2x1x32xf32>
    tpu.vector_store %arg5[%c0_39, %c3_40, %c0_41], %133 {strides = array<i32>} : memref<2x8x32xf32, #tpu.memory_space<vmem>>, vector<2x1x32xf32>,
    %c0_42 = arith.constant 0 : index
    %c4 = arith.constant 4 : index
    %c0_43 = arith.constant 0 : index
    %134 = vector.load %arg1[%c0_42, %c4, %c0_43] : memref<2x8x128xf32, #tpu.memory_space<vmem>>, vector<2x1x128xf32>
    %135 = vector.shape_cast %134 : vector<2x1x128xf32> to vector<2x128xf32>
    %cst_44 = arith.constant dense<0.000000e+00> : vector<2x128xf32>
    %136 = tpu.matmul %130, %5, %cst_44 {dimension_numbers = #tpu.dot_dimension_numbers<[1], [0], [0], [1], [0, 0, 1, 1], [], []>} : vector<2x32xf32>, vector<32x128xf32>, vector<2x128xf32> -> vector<2x128xf32>
    %137 = arith.addf %135, %136 : vector<2x128xf32>
    %138 = vector.extract_strided_slice %137 {offsets = [0, 0], sizes = [2, 32], strides = [1, 1]} : vector<2x128xf32> to vector<2x32xf32>
    %139 = arith.negf %138 : vector<2x32xf32>
    %140 = math.exp %139 : vector<2x32xf32>
    %cst_45 = arith.constant 1.000000e+00 : f32
    %141 = vector.broadcast %cst_45 : f32 to vector<2x32xf32>
    %142 = arith.addf %141, %140 : vector<2x32xf32>
    %143 = arith.divf %141, %142 : vector<2x32xf32>
    %144 = vector.extract_strided_slice %137 {offsets = [0, 32], sizes = [2, 32], strides = [1, 1]} : vector<2x128xf32> to vector<2x32xf32>
    %145 = arith.negf %144 : vector<2x32xf32>
    %146 = math.exp %145 : vector<2x32xf32>
    %cst_46 = arith.constant 1.000000e+00 : f32
    %147 = vector.broadcast %cst_46 : f32 to vector<2x32xf32>
    %148 = arith.addf %147, %146 : vector<2x32xf32>
    %149 = arith.divf %147, %148 : vector<2x32xf32>
    %150 = vector.extract_strided_slice %137 {offsets = [0, 64], sizes = [2, 32], strides = [1, 1]} : vector<2x128xf32> to vector<2x32xf32>
    %151 = math.tanh %150 : vector<2x32xf32>
    %152 = vector.extract_strided_slice %137 {offsets = [0, 96], sizes = [2, 32], strides = [1, 1]} : vector<2x128xf32> to vector<2x32xf32>
    %153 = arith.negf %152 : vector<2x32xf32>
    %154 = math.exp %153 : vector<2x32xf32>
    %cst_47 = arith.constant 1.000000e+00 : f32
    %155 = vector.broadcast %cst_47 : f32 to vector<2x32xf32>
    %156 = arith.addf %155, %154 : vector<2x32xf32>
    %157 = arith.divf %155, %156 : vector<2x32xf32>
    %158 = arith.mulf %149, %128 : vector<2x32xf32>
    %159 = arith.mulf %143, %151 : vector<2x32xf32>
    %160 = arith.addf %158, %159 : vector<2x32xf32>
    %161 = math.tanh %160 : vector<2x32xf32>
    %162 = arith.mulf %157, %161 : vector<2x32xf32>
    %c0_48 = arith.constant 0 : index
    %c4_49 = arith.constant 4 : index
    %c0_50 = arith.constant 0 : index
    %163 = vector.load %arg5[%c0_48, %c4_49, %c0_50] : memref<2x8x32xf32, #tpu.memory_space<vmem>>, vector<2x1x32xf32>
    %164 = vector.shape_cast %163 : vector<2x1x32xf32> to vector<2x32xf32>
    %165 = vector.shape_cast %162 : vector<2x32xf32> to vector<2x1x32xf32>
    tpu.vector_store %arg5[%c0_48, %c4_49, %c0_50], %165 {strides = array<i32>} : memref<2x8x32xf32, #tpu.memory_space<vmem>>, vector<2x1x32xf32>,
    %c0_51 = arith.constant 0 : index
    %c5 = arith.constant 5 : index
    %c0_52 = arith.constant 0 : index
    %166 = vector.load %arg1[%c0_51, %c5, %c0_52] : memref<2x8x128xf32, #tpu.memory_space<vmem>>, vector<2x1x128xf32>
    %167 = vector.shape_cast %166 : vector<2x1x128xf32> to vector<2x128xf32>
    %cst_53 = arith.constant dense<0.000000e+00> : vector<2x128xf32>
    %168 = tpu.matmul %162, %5, %cst_53 {dimension_numbers = #tpu.dot_dimension_numbers<[1], [0], [0], [1], [0, 0, 1, 1], [], []>} : vector<2x32xf32>, vector<32x128xf32>, vector<2x128xf32> -> vector<2x128xf32>
    %169 = arith.addf %167, %168 : vector<2x128xf32>
    %170 = vector.extract_strided_slice %169 {offsets = [0, 0], sizes = [2, 32], strides = [1, 1]} : vector<2x128xf32> to vector<2x32xf32>
    %171 = arith.negf %170 : vector<2x32xf32>
    %172 = math.exp %171 : vector<2x32xf32>
    %cst_54 = arith.constant 1.000000e+00 : f32
    %173 = vector.broadcast %cst_54 : f32 to vector<2x32xf32>
    %174 = arith.addf %173, %172 : vector<2x32xf32>
    %175 = arith.divf %173, %174 : vector<2x32xf32>
    %176 = vector.extract_strided_slice %169 {offsets = [0, 32], sizes = [2, 32], strides = [1, 1]} : vector<2x128xf32> to vector<2x32xf32>
    %177 = arith.negf %176 : vector<2x32xf32>
    %178 = math.exp %177 : vector<2x32xf32>
    %cst_55 = arith.constant 1.000000e+00 : f32
    %179 = vector.broadcast %cst_55 : f32 to vector<2x32xf32>
    %180 = arith.addf %179, %178 : vector<2x32xf32>
    %181 = arith.divf %179, %180 : vector<2x32xf32>
    %182 = vector.extract_strided_slice %169 {offsets = [0, 64], sizes = [2, 32], strides = [1, 1]} : vector<2x128xf32> to vector<2x32xf32>
    %183 = math.tanh %182 : vector<2x32xf32>
    %184 = vector.extract_strided_slice %169 {offsets = [0, 96], sizes = [2, 32], strides = [1, 1]} : vector<2x128xf32> to vector<2x32xf32>
    %185 = arith.negf %184 : vector<2x32xf32>
    %186 = math.exp %185 : vector<2x32xf32>
    %cst_56 = arith.constant 1.000000e+00 : f32
    %187 = vector.broadcast %cst_56 : f32 to vector<2x32xf32>
    %188 = arith.addf %187, %186 : vector<2x32xf32>
    %189 = arith.divf %187, %188 : vector<2x32xf32>
    %190 = arith.mulf %181, %160 : vector<2x32xf32>
    %191 = arith.mulf %175, %183 : vector<2x32xf32>
    %192 = arith.addf %190, %191 : vector<2x32xf32>
    %193 = math.tanh %192 : vector<2x32xf32>
    %194 = arith.mulf %189, %193 : vector<2x32xf32>
    %c0_57 = arith.constant 0 : index
    %c5_58 = arith.constant 5 : index
    %c0_59 = arith.constant 0 : index
    %195 = vector.load %arg5[%c0_57, %c5_58, %c0_59] : memref<2x8x32xf32, #tpu.memory_space<vmem>>, vector<2x1x32xf32>
    %196 = vector.shape_cast %195 : vector<2x1x32xf32> to vector<2x32xf32>
    %197 = vector.shape_cast %194 : vector<2x32xf32> to vector<2x1x32xf32>
    tpu.vector_store %arg5[%c0_57, %c5_58, %c0_59], %197 {strides = array<i32>} : memref<2x8x32xf32, #tpu.memory_space<vmem>>, vector<2x1x32xf32>,
    %c0_60 = arith.constant 0 : index
    %c6 = arith.constant 6 : index
    %c0_61 = arith.constant 0 : index
    %198 = vector.load %arg1[%c0_60, %c6, %c0_61] : memref<2x8x128xf32, #tpu.memory_space<vmem>>, vector<2x1x128xf32>
    %199 = vector.shape_cast %198 : vector<2x1x128xf32> to vector<2x128xf32>
    %cst_62 = arith.constant dense<0.000000e+00> : vector<2x128xf32>
    %200 = tpu.matmul %194, %5, %cst_62 {dimension_numbers = #tpu.dot_dimension_numbers<[1], [0], [0], [1], [0, 0, 1, 1], [], []>} : vector<2x32xf32>, vector<32x128xf32>, vector<2x128xf32> -> vector<2x128xf32>
    %201 = arith.addf %199, %200 : vector<2x128xf32>
    %202 = vector.extract_strided_slice %201 {offsets = [0, 0], sizes = [2, 32], strides = [1, 1]} : vector<2x128xf32> to vector<2x32xf32>
    %203 = arith.negf %202 : vector<2x32xf32>
    %204 = math.exp %203 : vector<2x32xf32>
    %cst_63 = arith.constant 1.000000e+00 : f32
    %205 = vector.broadcast %cst_63 : f32 to vector<2x32xf32>
    %206 = arith.addf %205, %204 : vector<2x32xf32>
    %207 = arith.divf %205, %206 : vector<2x32xf32>
    %208 = vector.extract_strided_slice %201 {offsets = [0, 32], sizes = [2, 32], strides = [1, 1]} : vector<2x128xf32> to vector<2x32xf32>
    %209 = arith.negf %208 : vector<2x32xf32>
    %210 = math.exp %209 : vector<2x32xf32>
    %cst_64 = arith.constant 1.000000e+00 : f32
    %211 = vector.broadcast %cst_64 : f32 to vector<2x32xf32>
    %212 = arith.addf %211, %210 : vector<2x32xf32>
    %213 = arith.divf %211, %212 : vector<2x32xf32>
    %214 = vector.extract_strided_slice %201 {offsets = [0, 64], sizes = [2, 32], strides = [1, 1]} : vector<2x128xf32> to vector<2x32xf32>
    %215 = math.tanh %214 : vector<2x32xf32>
    %216 = vector.extract_strided_slice %201 {offsets = [0, 96], sizes = [2, 32], strides = [1, 1]} : vector<2x128xf32> to vector<2x32xf32>
    %217 = arith.negf %216 : vector<2x32xf32>
    %218 = math.exp %217 : vector<2x32xf32>
    %cst_65 = arith.constant 1.000000e+00 : f32
    %219 = vector.broadcast %cst_65 : f32 to vector<2x32xf32>
    %220 = arith.addf %219, %218 : vector<2x32xf32>
    %221 = arith.divf %219, %220 : vector<2x32xf32>
    %222 = arith.mulf %213, %192 : vector<2x32xf32>
    %223 = arith.mulf %207, %215 : vector<2x32xf32>
    %224 = arith.addf %222, %223 : vector<2x32xf32>
    %225 = math.tanh %224 : vector<2x32xf32>
    %226 = arith.mulf %221, %225 : vector<2x32xf32>
    %c0_66 = arith.constant 0 : index
    %c6_67 = arith.constant 6 : index
    %c0_68 = arith.constant 0 : index
    %227 = vector.load %arg5[%c0_66, %c6_67, %c0_68] : memref<2x8x32xf32, #tpu.memory_space<vmem>>, vector<2x1x32xf32>
    %228 = vector.shape_cast %227 : vector<2x1x32xf32> to vector<2x32xf32>
    %229 = vector.shape_cast %226 : vector<2x32xf32> to vector<2x1x32xf32>
    tpu.vector_store %arg5[%c0_66, %c6_67, %c0_68], %229 {strides = array<i32>} : memref<2x8x32xf32, #tpu.memory_space<vmem>>, vector<2x1x32xf32>,
    %c0_69 = arith.constant 0 : index
    %c7 = arith.constant 7 : index
    %c0_70 = arith.constant 0 : index
    %230 = vector.load %arg1[%c0_69, %c7, %c0_70] : memref<2x8x128xf32, #tpu.memory_space<vmem>>, vector<2x1x128xf32>
    %231 = vector.shape_cast %230 : vector<2x1x128xf32> to vector<2x128xf32>
    %cst_71 = arith.constant dense<0.000000e+00> : vector<2x128xf32>
    %232 = tpu.matmul %226, %5, %cst_71 {dimension_numbers = #tpu.dot_dimension_numbers<[1], [0], [0], [1], [0, 0, 1, 1], [], []>} : vector<2x32xf32>, vector<32x128xf32>, vector<2x128xf32> -> vector<2x128xf32>
    %233 = arith.addf %231, %232 : vector<2x128xf32>
    %234 = vector.extract_strided_slice %233 {offsets = [0, 0], sizes = [2, 32], strides = [1, 1]} : vector<2x128xf32> to vector<2x32xf32>
    %235 = arith.negf %234 : vector<2x32xf32>
    %236 = math.exp %235 : vector<2x32xf32>
    %cst_72 = arith.constant 1.000000e+00 : f32
    %237 = vector.broadcast %cst_72 : f32 to vector<2x32xf32>
    %238 = arith.addf %237, %236 : vector<2x32xf32>
    %239 = arith.divf %237, %238 : vector<2x32xf32>
    %240 = vector.extract_strided_slice %233 {offsets = [0, 32], sizes = [2, 32], strides = [1, 1]} : vector<2x128xf32> to vector<2x32xf32>
    %241 = arith.negf %240 : vector<2x32xf32>
    %242 = math.exp %241 : vector<2x32xf32>
    %cst_73 = arith.constant 1.000000e+00 : f32
    %243 = vector.broadcast %cst_73 : f32 to vector<2x32xf32>
    %244 = arith.addf %243, %242 : vector<2x32xf32>
    %245 = arith.divf %243, %244 : vector<2x32xf32>
    %246 = vector.extract_strided_slice %233 {offsets = [0, 64], sizes = [2, 32], strides = [1, 1]} : vector<2x128xf32> to vector<2x32xf32>
    %247 = math.tanh %246 : vector<2x32xf32>
    %248 = vector.extract_strided_slice %233 {offsets = [0, 96], sizes = [2, 32], strides = [1, 1]} : vector<2x128xf32> to vector<2x32xf32>
    %249 = arith.negf %248 : vector<2x32xf32>
    %250 = math.exp %249 : vector<2x32xf32>
    %cst_74 = arith.constant 1.000000e+00 : f32
    %251 = vector.broadcast %cst_74 : f32 to vector<2x32xf32>
    %252 = arith.addf %251, %250 : vector<2x32xf32>
    %253 = arith.divf %251, %252 : vector<2x32xf32>
    %254 = arith.mulf %245, %224 : vector<2x32xf32>
    %255 = arith.mulf %239, %247 : vector<2x32xf32>
    %256 = arith.addf %254, %255 : vector<2x32xf32>
    %257 = math.tanh %256 : vector<2x32xf32>
    %258 = arith.mulf %253, %257 : vector<2x32xf32>
    %c0_75 = arith.constant 0 : index
    %c7_76 = arith.constant 7 : index
    %c0_77 = arith.constant 0 : index
    %259 = vector.load %arg5[%c0_75, %c7_76, %c0_77] : memref<2x8x32xf32, #tpu.memory_space<vmem>>, vector<2x1x32xf32>
    %260 = vector.shape_cast %259 : vector<2x1x32xf32> to vector<2x32xf32>
    %261 = vector.shape_cast %258 : vector<2x32xf32> to vector<2x1x32xf32>
    tpu.vector_store %arg5[%c0_75, %c7_76, %c0_77], %261 {strides = array<i32>} : memref<2x8x32xf32, #tpu.memory_space<vmem>>, vector<2x1x32xf32>,
    %c0_78 = arith.constant 0 : index
    %c0_79 = arith.constant 0 : index
    %262 = vector.load %arg6[%c0_78, %c0_79] : memref<2x32xf32, #tpu.memory_space<vmem>>, vector<2x32xf32>
    tpu.vector_store %arg6[%c0_78, %c0_79], %258 {strides = array<i32>} : memref<2x32xf32, #tpu.memory_space<vmem>>, vector<2x32xf32>,
    %c0_80 = arith.constant 0 : index
    %c0_81 = arith.constant 0 : index
    %263 = vector.load %arg7[%c0_80, %c0_81] : memref<2x32xf32, #tpu.memory_space<vmem>>, vector<2x32xf32>
    tpu.vector_store %arg7[%c0_80, %c0_81], %256 {strides = array<i32>} : memref<2x32xf32, #tpu.memory_space<vmem>>, vector<2x32xf32>,
    return
  }
  func.func @transform_0(%arg0: i32) -> (i32, i32, i32) {
    %c0_i32 = arith.constant 0 : i32
    %c0_i32_0 = arith.constant 0 : i32
    %c0_i32_1 = arith.constant 0 : i32
    return %c0_i32, %arg0, %c0_i32_0 : i32, i32, i32
  }
  func.func @transform_1(%arg0: i32) -> (i32, i32) {
    %c0_i32 = arith.constant 0 : i32
    %c0_i32_0 = arith.constant 0 : i32
    %c0_i32_1 = arith.constant 0 : i32
    return %c0_i32, %c0_i32_0 : i32, i32
  }
  func.func @transform_2(%arg0: i32) -> (i32, i32) {
    %c0_i32 = arith.constant 0 : i32
    %c0_i32_0 = arith.constant 0 : i32
    %c0_i32_1 = arith.constant 0 : i32
    return %c0_i32, %c0_i32_0 : i32, i32
  }
  func.func @transform_3(%arg0: i32) -> (i32, i32) {
    %c0_i32 = arith.constant 0 : i32
    %c0_i32_0 = arith.constant 0 : i32
    %c0_i32_1 = arith.constant 0 : i32
    return %c0_i32, %c0_i32_0 : i32, i32
  }
  func.func @transform_4(%arg0: i32) -> (i32, i32, i32) {
    %c0_i32 = arith.constant 0 : i32
    %c0_i32_0 = arith.constant 0 : i32
    %c0_i32_1 = arith.constant 0 : i32
    return %c0_i32, %arg0, %c0_i32_0 : i32, i32, i32
  }
}

module attributes {stable_mosaic.version = 11 : i64} {
  func.func @_linear_kernel(%arg0: i32, %arg1: i32, %arg2: memref<16x32xf32, #tpu.memory_space<vmem>>, %arg3: memref<32x128xf32, #tpu.memory_space<vmem>>, %arg4: memref<1x128xf32, #tpu.memory_space<vmem>>, %arg5: memref<16x128xf32, #tpu.memory_space<vmem>>) attributes {dimension_semantics = [#tpu.dimension_semantics<parallel>, #tpu.dimension_semantics<parallel>], iteration_bounds = array<i64: 1, 1>, scalar_prefetch = 0 : i64, scratch_operands = 0 : i64, tpu.core_type = #tpu.core_type<tc>, window_params = [{transform_indices = @transform_0, window_bounds = array<i64: 16, 32>}, {transform_indices = @transform_1, window_bounds = array<i64: 32, 128>}, {transform_indices = @transform_2, window_bounds = array<i64: 1, 128>}, {transform_indices = @transform_3, window_bounds = array<i64: 16, 128>}]} {
    %c0 = arith.constant 0 : index
    %c0_0 = arith.constant 0 : index
    %0 = vector.load %arg2[%c0, %c0_0] : memref<16x32xf32, #tpu.memory_space<vmem>>, vector<16x32xf32>
    %c0_1 = arith.constant 0 : index
    %c0_2 = arith.constant 0 : index
    %1 = vector.load %arg3[%c0_1, %c0_2] : memref<32x128xf32, #tpu.memory_space<vmem>>, vector<32x128xf32>
    %cst = arith.constant dense<0.000000e+00> : vector<16x128xf32>
    %2 = tpu.matmul %0, %1, %cst {dimension_numbers = #tpu.dot_dimension_numbers<[1], [0], [0], [1], [0, 0, 1, 1], [], []>} : vector<16x32xf32>, vector<32x128xf32>, vector<16x128xf32> -> vector<16x128xf32>
    %c0_3 = arith.constant 0 : index
    %c0_4 = arith.constant 0 : index
    %3 = vector.load %arg4[%c0_3, %c0_4] : memref<1x128xf32, #tpu.memory_space<vmem>>, vector<1x128xf32>
    %4 = vector.broadcast %3 : vector<1x128xf32> to vector<16x128xf32>
    %5 = arith.addf %2, %4 : vector<16x128xf32>
    %c0_5 = arith.constant 0 : index
    %c0_6 = arith.constant 0 : index
    %6 = vector.load %arg5[%c0_5, %c0_6] : memref<16x128xf32, #tpu.memory_space<vmem>>, vector<16x128xf32>
    tpu.vector_store %arg5[%c0_5, %c0_6], %5 {strides = array<i32>} : memref<16x128xf32, #tpu.memory_space<vmem>>, vector<16x128xf32>,
    return
  }
  func.func @transform_0(%arg0: i32, %arg1: i32) -> (i32, i32) {
    %c0_i32 = arith.constant 0 : i32
    %c0_i32_0 = arith.constant 0 : i32
    return %arg0, %c0_i32 : i32, i32
  }
  func.func @transform_1(%arg0: i32, %arg1: i32) -> (i32, i32) {
    %c0_i32 = arith.constant 0 : i32
    %c0_i32_0 = arith.constant 0 : i32
    return %c0_i32, %arg1 : i32, i32
  }
  func.func @transform_2(%arg0: i32, %arg1: i32) -> (i32, i32) {
    %c0_i32 = arith.constant 0 : i32
    %c0_i32_0 = arith.constant 0 : i32
    return %c0_i32, %arg1 : i32, i32
  }
  func.func @transform_3(%arg0: i32, %arg1: i32) -> (i32, i32) {
    %c0_i32 = arith.constant 0 : i32
    return %arg0, %arg1 : i32, i32
  }
}

module attributes {stable_mosaic.version = 11 : i64} {
  func.func @_decode_kernel(%arg0: i32, %arg1: memref<16x32xf32, #tpu.memory_space<vmem>>, %arg2: memref<32x64xf32, #tpu.memory_space<vmem>>, %arg3: memref<1x64xf32, #tpu.memory_space<vmem>>, %arg4: memref<16x64xf32, #tpu.memory_space<vmem>>) attributes {dimension_semantics = [#tpu.dimension_semantics<parallel>], iteration_bounds = array<i64: 1>, scalar_prefetch = 0 : i64, scratch_operands = 0 : i64, tpu.core_type = #tpu.core_type<tc>, window_params = [{transform_indices = @transform_0, window_bounds = array<i64: 16, 32>}, {pipeline_mode = #tpu.pipeline_mode<synchronous>, transform_indices = @transform_1, window_bounds = array<i64: 32, 64>}, {pipeline_mode = #tpu.pipeline_mode<synchronous>, transform_indices = @transform_2, window_bounds = array<i64: 1, 64>}, {transform_indices = @transform_3, window_bounds = array<i64: 16, 64>}]} {
    %c0 = arith.constant 0 : index
    %c0_0 = arith.constant 0 : index
    %0 = vector.load %arg1[%c0, %c0_0] : memref<16x32xf32, #tpu.memory_space<vmem>>, vector<16x32xf32>
    %c0_1 = arith.constant 0 : index
    %c0_2 = arith.constant 0 : index
    %1 = vector.load %arg2[%c0_1, %c0_2] : memref<32x64xf32, #tpu.memory_space<vmem>>, vector<32x64xf32>
    %cst = arith.constant dense<0.000000e+00> : vector<16x64xf32>
    %2 = tpu.matmul %0, %1, %cst {dimension_numbers = #tpu.dot_dimension_numbers<[1], [0], [0], [1], [0, 0, 1, 1], [], []>} : vector<16x32xf32>, vector<32x64xf32>, vector<16x64xf32> -> vector<16x64xf32>
    %c0_3 = arith.constant 0 : index
    %c0_4 = arith.constant 0 : index
    %3 = vector.load %arg3[%c0_3, %c0_4] : memref<1x64xf32, #tpu.memory_space<vmem>>, vector<1x64xf32>
    %4 = vector.broadcast %3 : vector<1x64xf32> to vector<16x64xf32>
    %5 = arith.addf %2, %4 : vector<16x64xf32>
    %cst_5 = arith.constant dense<0xFF800000> : vector<16xf32>
    %6 = vector.multi_reduction <maximumf>, %5, %cst_5 [1] : vector<16x64xf32> to vector<16xf32>
    %7 = vector.shape_cast %6 : vector<16xf32> to vector<16x1xf32>
    %8 = vector.broadcast %7 : vector<16x1xf32> to vector<16x64xf32>
    %9 = arith.subf %5, %8 : vector<16x64xf32>
    %10 = math.exp %9 : vector<16x64xf32>
    %cst_6 = arith.constant dense<0.000000e+00> : vector<16xf32>
    %11 = vector.multi_reduction <add>, %10, %cst_6 [1] : vector<16x64xf32> to vector<16xf32>
    %12 = vector.shape_cast %11 : vector<16xf32> to vector<16x1xf32>
    %13 = math.log %12 : vector<16x1xf32>
    %14 = vector.broadcast %13 : vector<16x1xf32> to vector<16x64xf32>
    %15 = arith.subf %9, %14 : vector<16x64xf32>
    %c0_7 = arith.constant 0 : index
    %c0_8 = arith.constant 0 : index
    %16 = vector.load %arg4[%c0_7, %c0_8] : memref<16x64xf32, #tpu.memory_space<vmem>>, vector<16x64xf32>
    tpu.vector_store %arg4[%c0_7, %c0_8], %15 {strides = array<i32>} : memref<16x64xf32, #tpu.memory_space<vmem>>, vector<16x64xf32>,
    return
  }
  func.func @transform_0(%arg0: i32) -> (i32, i32) {
    %c0_i32 = arith.constant 0 : i32
    %c0_i32_0 = arith.constant 0 : i32
    return %arg0, %c0_i32 : i32, i32
  }
  func.func @transform_1(%arg0: i32) -> (i32, i32) {
    %c0_i32 = arith.constant 0 : i32
    %c0_i32_0 = arith.constant 0 : i32
    %c0_i32_1 = arith.constant 0 : i32
    return %c0_i32, %c0_i32_0 : i32, i32
  }
  func.func @transform_2(%arg0: i32) -> (i32, i32) {
    %c0_i32 = arith.constant 0 : i32
    %c0_i32_0 = arith.constant 0 : i32
    %c0_i32_1 = arith.constant 0 : i32
    return %c0_i32, %c0_i32_0 : i32, i32
  }
  func.func @transform_3(%arg0: i32) -> (i32, i32) {
    %c0_i32 = arith.constant 0 : i32
    %c0_i32_0 = arith.constant 0 : i32
    return %arg0, %c0_i32 : i32, i32
  }
}

</mosaic_0001>

<llo_original>
// kernel: lstm_model_forward.5
$region0: #{lstm_model_forward.5}
  #allocation0 [shape = 'u32[]', space=smem, size = 0x4, offset = 0x4, fixed_abs, tag = 'smem constant byte address 0x4 - core index']
  #allocation1 [shape = 'u32[72,128]{1,0:T(1,128)}', space=vmem, size = 0x9000, scoped, tag = 'internal scratch']
  %s0 = inlined_call_operand.vmem [shape: f32[16,32], index: 0, kind: input, shape index: {}]
  %s1 = inlined_call_operand.vmem [shape: f32[32,64], index: 1, kind: input, shape index: {}]
  %s2 = inlined_call_operand.vmem [shape: f32[1,64], index: 2, kind: input, shape index: {}]
  %s3 = inlined_call_operand.hbm [shape: f32[16,64], index: 3, kind: output, shape index: {}]
  %s4 = sld [smem:[#allocation0]]
  $region22: #{lstm_model_forward.5} parent=0
    _
  %s6 = ssub.s32 1, %s4
  %s7 = scalar_select 0, %s6, %s4
  $region1: #{lstm_model_forward.5} parent=0
    #allocation2 [shape = 'u8[8192]{0}', space=vmem, size = 0x2000, scoped, tag = 'output window, operand 0, single buffered']
    #allocation3 [shape = 's32[1]{0}', space=sflag, size = 0x4, scoped, tag = 'scoped memory for lstm_model_forward.5']
    %8 = vsyncpa [#allocation3], 0
    // Predicated region
    $region2: #{lstm_model_forward.5} parent=1 // pred_check
      _
    $region3: #{lstm_model_forward.5} parent=1 // pred_check_branch
      %10 = sbr.rel (0) target = $region5
    $region4: #{lstm_model_forward.5} parent=1 // pred_region
      _
    $region5: #{lstm_model_forward.5} parent=1 // pred_fallthru
      _
    // Predicated region
    $region6: #{lstm_model_forward.5} parent=1 // pred_check
      _
    $region7: #{lstm_model_forward.5} parent=1 // pred_check_branch
      %12 = sbr.rel (0) target = $region9
    $region8: #{lstm_model_forward.5} parent=1 // pred_region
      _
    $region9: #{lstm_model_forward.5} parent=1 // pred_fallthru
      _
    // Predicated region
    $region10: #{lstm_model_forward.5} parent=1 // pred_check
      _
    $region11: #{lstm_model_forward.5} parent=1 // pred_check_branch
      %14 = sbr.rel (0) target = $region13
    $region12: #{lstm_model_forward.5} parent=1 // pred_region
      _
    $region13: #{lstm_model_forward.5} parent=1 // pred_fallthru
      _
    %v15 = vld [vmem:[%s0] sm:$0xff]
    %v16 = vld [vmem:[%s0 + $0x8] sm:$0xff]
    %v17 = vld [vmem:[%s1] sm:$0xff]
    %v18 = vld [vmem:[%s1 + $0x8] sm:$0xff]
    %v19 = vld [vmem:[%s1 + $0x10] sm:$0xff]
    %v20 = vld [vmem:[%s1 + $0x18] sm:$0xff]
    %v21 = vld [vmem:[%s2] sm:$0x1]
    %v23 = vperm.slane %v21, 0
    %vm25 = vcmask 261120
    %v27 = vsel %vm25, %v15, 0
    %v30 = vsel %vm25, %v16, 0
    %32 = vmatpush.msra.mxu0 0.0
    %33 = vmatpush.msra.mxu0 0.0
    %34 = vmatpush.msra.mxu0 0.0
    %35 = vmatpush.msra.mxu0 0.0
    %36 = vmatpush.msra.mxu0 0.0
    %37 = vmatpush.msra.mxu0 0.0
    %38 = vmatpush.msra.mxu0 0.0
    %39 = vmatpush.msra.mxu0 0.0
    %40 = vmatpush.msra.mxu0 0.0
    %41 = vmatpush.msra.mxu0 0.0
    %42 = vmatpush.msra.mxu0 0.0
    %43 = vmatpush.msra.mxu0 0.0
    %44 = vmatpush.msra.mxu0 %v20
    %45 = vmatpush.msra.mxu0 %v19
    %46 = vmatpush.msra.mxu0 %v18
    %47 = vmatpush.msra.mxu0 %v17
    %48 = vmatmul.f32.gmra.mxu0 %v27
    %v49 = vpop.f32.mrf.mxu0
    %v50 = vadd.f32 %v23, %v49
    %51 = vmatmul.f32.gmra.mxu0 %v30
    %v52 = vpop.f32.mrf.mxu0
    %v53 = vadd.f32 %v23, %v52
    %54 = vdwg.mxu0
    %vm55 = vcmask 523264
    %v56 = vsel %vm55, %v50, -inf
    %57 = vmax.xlane.f32.xlu0 %v56
    %v58 = vpop.xlane.xlu0 %57
    %v59 = vsel %vm55, %v53, -inf
    %60 = vmax.xlane.f32.xlu0 %v59
    %v61 = vpop.xlane.xlu0 %60
    %v62 = vsub.f32 %v50, %v58
    %v63 = vsub.f32 %v53, %v61
    %v64 = vmul.f32 %v62, 1.442695
    %v65 = vpow.pop %v64
    %v66 = vmul.f32 %v63, 1.442695
    %v67 = vpow.pop %v66
    %v68 = vsel %vm55, %v65, 0.0
    %69 = vadd.xlane.f32.xlu0 %v68
    %v70 = vpop.xlane.xlu0 %69
    %v71 = vsel %vm55, %v67, 0.0
    %72 = vadd.xlane.f32.xlu0 %v71
    %v73 = vpop.xlane.xlu0 %72
    %v74 = vlog2.pop %v70
    %v75 = vmul.f32 %v74, 0.6931472
    %v76 = vlog2.pop %v73
    %v77 = vmul.f32 %v76, 0.6931472
    %v78 = vsub.f32 %v62, %v75
    %v79 = vsub.f32 %v63, %v77
    %80 = vst.msk [vmem:[#allocation2] sm:$0xff] %vm55, %v78
    %81 = vst.msk [vmem:[#allocation2 + $0x8] sm:$0xff] %vm55, %v79
    // Predicated region
    $region14: #{lstm_model_forward.5} parent=1 // pred_check
      _
    $region15: #{lstm_model_forward.5} parent=1 // pred_check_branch
      %83 = sbr.rel (0) target = $region17
    $region16: #{lstm_model_forward.5} parent=1 // pred_region
      %85 = vsyncadd [#allocation3], 0
      %s86 = sshll.u32 [#allocation2], 4
      %s87 = int_to_ptr.vmem [resolvable:$true] %s86
      %s88 = sshll.u32 %s3, 4
      %s89 = int_to_ptr.hbm [resolvable:$true] %s88
      %94 = dma.vmem_to_hbm [thread:$0]  %s87, 256, %s89, [#allocation3], 128, 128, 8
    $region17: #{lstm_model_forward.5} parent=1 // pred_fallthru
      _
    // Predicated region
    $region18: #{lstm_model_forward.5} parent=1 // pred_check
      _
    $region19: #{lstm_model_forward.5} parent=1 // pred_check_branch
      %96 = sbr.rel (0) target = $region21
    $region20: #{lstm_model_forward.5} parent=1 // pred_region
      %98 = dma.done [#allocation3], 256
    $region21: #{lstm_model_forward.5} parent=1 // pred_fallthru
      _
    %99 = vsyncpa [#allocation3], 1

// kernel: lstm_model_forward.3
$region0: #{lstm_model_forward.3}
  #allocation0 [shape = 'u32[]', space=smem, size = 0x4, offset = 0x4, fixed_abs, tag = 'smem constant byte address 0x4 - core index']
  #allocation1 [shape = 'u32[72,128]{1,0:T(1,128)}', space=vmem, size = 0x9000, scoped, tag = 'internal scratch']
  %s0 = inlined_call_operand.vmem [shape: f32[16,32], index: 0, kind: input, shape index: {}]
  %s1 = inlined_call_operand.vmem [shape: f32[32,128], index: 1, kind: input, shape index: {}]
  %s2 = inlined_call_operand.vmem [shape: f32[1,128], index: 2, kind: input, shape index: {}]
  %s3 = inlined_call_operand.vmem [shape: f32[16,128], index: 3, kind: output, shape index: {}]
  %s4 = sld [smem:[#allocation0]]
  $region22: #{lstm_model_forward.3} parent=0
    _
  %s6 = ssub.s32 1, %s4
  %s7 = scalar_select 0, %s6, %s4
  // Predicated region
  $region2: #{lstm_model_forward.3} parent=0 // pred_check
    _
  $region3: #{lstm_model_forward.3} parent=0 // pred_check_branch
    %9 = sbr.rel (0) target = $region5
  $region4: #{lstm_model_forward.3} parent=0 // pred_region
    _
  $region5: #{lstm_model_forward.3} parent=0 // pred_fallthru
    _
  // Predicated region
  $region6: #{lstm_model_forward.3} parent=0 // pred_check
    _
  $region7: #{lstm_model_forward.3} parent=0 // pred_check_branch
    %11 = sbr.rel (0) target = $region9
  $region8: #{lstm_model_forward.3} parent=0 // pred_region
    _
  $region9: #{lstm_model_forward.3} parent=0 // pred_fallthru
    _
  // Predicated region
  $region10: #{lstm_model_forward.3} parent=0 // pred_check
    _
  $region11: #{lstm_model_forward.3} parent=0 // pred_check_branch
    %13 = sbr.rel (0) target = $region13
  $region12: #{lstm_model_forward.3} parent=0 // pred_region
    _
  $region13: #{lstm_model_forward.3} parent=0 // pred_fallthru
    _
  %v14 = vld [vmem:[%s0] sm:$0xff]
  %v15 = vld [vmem:[%s0 + $0x8] sm:$0xff]
  %v16 = vld [vmem:[%s1] sm:$0xff]
  %v17 = vld [vmem:[%s1 + $0x8] sm:$0xff]
  %v18 = vld [vmem:[%s1 + $0x10] sm:$0xff]
  %v19 = vld [vmem:[%s1 + $0x18] sm:$0xff]
  %v20 = vld [vmem:[%s2] sm:$0x1]
  %v22 = vperm.slane %v20, 0
  %vm24 = vcmask 261120
  %v26 = vsel %vm24, %v14, 0
  %v29 = vsel %vm24, %v15, 0
  %31 = vmatpush.msra.mxu0 0.0
  %32 = vmatpush.msra.mxu0 0.0
  %33 = vmatpush.msra.mxu0 0.0
  %34 = vmatpush.msra.mxu0 0.0
  %35 = vmatpush.msra.mxu0 0.0
  %36 = vmatpush.msra.mxu0 0.0
  %37 = vmatpush.msra.mxu0 0.0
  %38 = vmatpush.msra.mxu0 0.0
  %39 = vmatpush.msra.mxu0 0.0
  %40 = vmatpush.msra.mxu0 0.0
  %41 = vmatpush.msra.mxu0 0.0
  %42 = vmatpush.msra.mxu0 0.0
  %43 = vmatpush.msra.mxu0 %v19
  %44 = vmatpush.msra.mxu0 %v18
  %45 = vmatpush.msra.mxu0 %v17
  %46 = vmatpush.msra.mxu0 %v16
  %47 = vmatmul.f32.gmra.mxu0 %v26
  %v48 = vpop.f32.mrf.mxu0
  %v49 = vadd.f32 %v22, %v48
  %50 = vmatmul.f32.gmra.mxu0 %v29
  %v51 = vpop.f32.mrf.mxu0
  %v52 = vadd.f32 %v22, %v51
  %53 = vdwg.mxu0
  %54 = vst [vmem:[%s3] sm:$0xff] %v49
  %55 = vst [vmem:[%s3 + $0x8] sm:$0xff] %v52
  // Predicated region
  $region14: #{lstm_model_forward.3} parent=0 // pred_check
    _
  $region15: #{lstm_model_forward.3} parent=0 // pred_check_branch
    %57 = sbr.rel (0) target = $region17
  $region16: #{lstm_model_forward.3} parent=0 // pred_region
    _
  $region17: #{lstm_model_forward.3} parent=0 // pred_fallthru
    _
  // Predicated region
  $region18: #{lstm_model_forward.3} parent=0 // pred_check
    _
  $region19: #{lstm_model_forward.3} parent=0 // pred_check_branch
    %59 = sbr.rel (0) target = $region21
  $region20: #{lstm_model_forward.3} parent=0 // pred_region
    _
  $region21: #{lstm_model_forward.3} parent=0 // pred_fallthru
    _

// kernel: lstm_model_forward.4
$region0: #{lstm_model_forward.4}
  #allocation0 [shape = 'u32[]', space=smem, size = 0x4, offset = 0x4, fixed_abs, tag = 'smem constant byte address 0x4 - core index']
  #allocation1 [shape = 'u32[72,128]{1,0:T(1,128)}', space=vmem, size = 0x9000, scoped, tag = 'internal scratch']
  #allocation2 [shape = 'f32[2,32]{1,0:T(2,128)}', space=vmem, size = 0x400, scoped, tag = 'scratch operand']
  #allocation3 [shape = 'f32[2,32]{1,0:T(2,128)}', space=vmem, size = 0x400, scoped, tag = 'scratch operand']
  %s0 = inlined_call_operand.vmem [shape: f32[2,8,128], index: 0, kind: input, shape index: {}]
  %s1 = inlined_call_operand.vmem [shape: f32[32,128], index: 1, kind: input, shape index: {}]
  %s2 = inlined_call_operand.vmem [shape: f32[2,32], index: 2, kind: input, shape index: {}]
  %s3 = inlined_call_operand.vmem [shape: f32[2,32], index: 3, kind: input, shape index: {}]
  %s4 = inlined_call_operand.vmem [shape: f32[2,8,32], index: 4, kind: output, shape index: {}]
  %s5 = sld [smem:[#allocation0]]
  $region30: #{lstm_model_forward.4} parent=0
    _
  %s7 = ssub.s32 1, %s5
  %s8 = scalar_select 0, %s7, %s5
  // Predicated region
  $region2: #{lstm_model_forward.4} parent=0 // pred_check
    _
  $region3: #{lstm_model_forward.4} parent=0 // pred_check_branch
    %10 = sbr.rel (0) target = $region5
  $region4: #{lstm_model_forward.4} parent=0 // pred_region
    _
  $region5: #{lstm_model_forward.4} parent=0 // pred_fallthru
    _
  // Predicated region
  $region6: #{lstm_model_forward.4} parent=0 // pred_check
    _
  $region7: #{lstm_model_forward.4} parent=0 // pred_check_branch
    %12 = sbr.rel (0) target = $region9
  $region8: #{lstm_model_forward.4} parent=0 // pred_region
    _
  $region9: #{lstm_model_forward.4} parent=0 // pred_fallthru
    _
  // Predicated region
  $region10: #{lstm_model_forward.4} parent=0 // pred_check
    _
  $region11: #{lstm_model_forward.4} parent=0 // pred_check_branch
    %14 = sbr.rel (0) target = $region13
  $region12: #{lstm_model_forward.4} parent=0 // pred_region
    _
  $region13: #{lstm_model_forward.4} parent=0 // pred_fallthru
    _
  // Predicated region
  $region14: #{lstm_model_forward.4} parent=0 // pred_check
    _
  $region15: #{lstm_model_forward.4} parent=0 // pred_check_branch
    %16 = sbr.rel (0) target = $region17
  $region16: #{lstm_model_forward.4} parent=0 // pred_region
    _
  $region17: #{lstm_model_forward.4} parent=0 // pred_fallthru
    _
  %p17 = scmp.eq.s32.totalorder 0, 0
  // Predicated region
  $region18: #{lstm_model_forward.4} parent=0 // pred_check
    %p18 = pneg %p17
  $region19: #{lstm_model_forward.4} parent=0 // pred_check_branch
    %20 = sbr.rel (%p18) target = $region21
  $region20: #{lstm_model_forward.4} parent=0 // pred_region
    %v21 = vld [vmem:[%s2] sm:$0x3]
    %vm22 = vcmask 254976
    %23 = vst.msk [vmem:[#allocation2] sm:$0x3] %vm22, %v21
    %v24 = vld [vmem:[%s3] sm:$0x3]
    %25 = vst.msk [vmem:[#allocation3] sm:$0x3] %vm22, %v24
  $region21: #{lstm_model_forward.4} parent=0 // pred_fallthru
    _
  %v26 = vld [vmem:[#allocation2] sm:$0x3]
  %v27 = vld [vmem:[#allocation3] sm:$0x3]
  %v28 = vld [vmem:[%s1] sm:$0xff]
  %v29 = vld [vmem:[%s1 + $0x8] sm:$0xff]
  %v30 = vld [vmem:[%s1 + $0x10] sm:$0xff]
  %v31 = vld [vmem:[%s1 + $0x18] sm:$0xff]
  %v32 = vld [vmem:[%s0] sm:$0x1]
  %v33 = vld [vmem:[%s0 + $0x8] sm:$0x1]
  %vm34 = vcmask 261120
  %v36 = vsel %vm34, %v26, 0
  %38 = vmatpush.msra.mxu0 0.0
  %39 = vmatpush.msra.mxu0 0.0
  %40 = vmatpush.msra.mxu0 0.0
  %41 = vmatpush.msra.mxu0 0.0
  %42 = vmatpush.msra.mxu0 0.0
  %43 = vmatpush.msra.mxu0 0.0
  %44 = vmatpush.msra.mxu0 0.0
  %45 = vmatpush.msra.mxu0 0.0
  %46 = vmatpush.msra.mxu0 0.0
  %47 = vmatpush.msra.mxu0 0.0
  %48 = vmatpush.msra.mxu0 0.0
  %49 = vmatpush.msra.mxu0 0.0
  %50 = vmatpush.msra.mxu0 %v31
  %51 = vmatpush.msra.mxu0 %v30
  %52 = vmatpush.msra.mxu0 %v29
  %53 = vmatpush.msra.mxu0 %v28
  %54 = vmatmul.f32.gmra.mxu0 %v36
  %v55 = vpop.f32.mrf.mxu0
  %v56 = vadd.f32 0.0, %v55
  %57 = vdwg.mxu0
  %v59 = vrot.slane %v56, 1
  %v62 = vadd.f32 %v32, %v56
  %v63 = vadd.f32 %v33, %v59
  %v64 = vxor.u32 %v62, 2147483648
  %v65 = vxor.u32 %v63, 2147483648
  %v66 = vmul.f32 %v64, 1.442695
  %v67 = vpow.pop %v66
  %v68 = vmul.f32 %v65, 1.442695
  %v69 = vpow.pop %v68
  %v70 = vadd.f32 %v67, 1.0
  %v71 = vadd.f32 %v69, 1.0
  %v72 = vrcp.pop %v70
  %v73 = vmul.f32 %v70, %v72
  %v74 = vsub.f32 1.0, %v73
  %v75 = vmul.f32 %v72, %v74
  %v76 = vadd.f32 %v72, %v75
  %vm77 = vweird.f32 %v70
  %vm78 = vweird.f32 %v72
  %vm79 = vmor %vm77, %vm78
  %v80 = vsel %vm79, %v72, %v76
  %v81 = vand.u32 2147483647, %v70
  %vm82 = vcmp.eq.f32.partialorder %v81, 8.507059e+37
  %v83 = vand.u32 %v70, 2147483648
  %v84 = vor.u32 1.1754944e-38, %v83
  %v85 = vsel %vm82, %v84, %v80
  %v86 = vmul.f32 1.0, %v85
  %v87 = vrcp.pop %v71
  %v88 = vmul.f32 %v71, %v87
  %v89 = vsub.f32 1.0, %v88
  %v90 = vmul.f32 %v87, %v89
  %v91 = vadd.f32 %v87, %v90
  %vm92 = vweird.f32 %v71
  %vm93 = vweird.f32 %v87
  %vm94 = vmor %vm92, %vm93
  %v95 = vsel %vm94, %v87, %v91
  %v96 = vand.u32 2147483647, %v71
  %vm97 = vcmp.eq.f32.partialorder %v96, 8.507059e+37
  %v98 = vand.u32 %v71, 2147483648
  %v99 = vor.u32 1.1754944e-38, %v98
  %v100 = vsel %vm97, %v99, %v95
  %v101 = vmul.f32 1.0, %v100
  %v102 = vtanh.pop %v62
  %v103 = vtanh.pop %v63
  %v105 = vrot.slane %v27, 1
  %106 = vrot.lane.b32.xlu0 %v27, 32
  %v107 = vpop.permute.xlu0 %106
  %108 = vrot.lane.b32.xlu0 %v105, 32
  %v109 = vpop.permute.xlu0 %108
  %v112 = vmul.f32 %v86, %v107
  %v113 = vmul.f32 %v101, %v109
  %116 = vrot.lane.b32.xlu0 %v102, 64
  %v117 = vpop.permute.xlu0 %116
  %118 = vrot.lane.b32.xlu0 %v103, 64
  %v119 = vpop.permute.xlu0 %118
  %v122 = vmul.f32 %v86, %v117
  %v123 = vmul.f32 %v101, %v119
  %126 = vrot.lane.b32.xlu0 %v122, 32
  %v127 = vpop.permute.xlu0 %126
  %128 = vrot.lane.b32.xlu0 %v123, 32
  %v129 = vpop.permute.xlu0 %128
  %v132 = vadd.f32 %v112, %v127
  %v133 = vadd.f32 %v113, %v129
  %v134 = vtanh.pop %v132
  %v135 = vtanh.pop %v133
  %138 = vrot.lane.b32.xlu0 %v134, 64
  %v139 = vpop.permute.xlu0 %138
  %140 = vrot.lane.b32.xlu0 %v135, 64
  %v141 = vpop.permute.xlu0 %140
  %v144 = vmul.f32 %v86, %v139
  %v145 = vmul.f32 %v101, %v141
  %148 = vrot.lane.b32.xlu0 %v144, 32
  %v149 = vpop.permute.xlu0 %148
  %150 = vrot.lane.b32.xlu0 %v145, 32
  %v151 = vpop.permute.xlu0 %150
  %vm154 = vcmask 253952
  %155 = vst.msk [vmem:[%s4] sm:$0x1] %vm154, %v149
  %156 = vst.msk [vmem:[%s4 + $0x8] sm:$0x1] %vm154, %v151
  %v157 = vld [vmem:[%s0 + $0x1] sm:$0x1]
  %v158 = vld [vmem:[%s0 + $0x9] sm:$0x1]
  %v159 = vrot.slane %v145, 7
  %vm160 = vcmask 1041409
  %v161 = vsel %vm160, %v159, %v144
  %162 = vrot.lane.b32.xlu0 %v161, 32
  %v163 = vpop.permute.xlu0 %162
  %v164 = vsel %vm34, %v163, 0
  %166 = vmatpush.msra.mxu0 0.0
  %167 = vmatpush.msra.mxu0 0.0
  %168 = vmatpush.msra.mxu0 0.0
  %169 = vmatpush.msra.mxu0 0.0
  %170 = vmatpush.msra.mxu0 0.0
  %171 = vmatpush.msra.mxu0 0.0
  %172 = vmatpush.msra.mxu0 0.0
  %173 = vmatpush.msra.mxu0 0.0
  %174 = vmatpush.msra.mxu0 0.0
  %175 = vmatpush.msra.mxu0 0.0
  %176 = vmatpush.msra.mxu0 0.0
  %177 = vmatpush.msra.mxu0 0.0
  %178 = vmatpush.msra.mxu0 %v31
  %179 = vmatpush.msra.mxu0 %v30
  %180 = vmatpush.msra.mxu0 %v29
  %181 = vmatpush.msra.mxu0 %v28
  %182 = vmatmul.f32.gmra.mxu0 %v164
  %v183 = vpop.f32.mrf.mxu0
  %v184 = vadd.f32 0.0, %v183
  %185 = vdwg.mxu0
  %v187 = vrot.slane %v184, 1
  %v190 = vadd.f32 %v157, %v184
  %v191 = vadd.f32 %v158, %v187
  %v192 = vxor.u32 %v190, 2147483648
  %v193 = vxor.u32 %v191, 2147483648
  %v194 = vmul.f32 %v192, 1.442695
  %v195 = vpow.pop %v194
  %v196 = vmul.f32 %v193, 1.442695
  %v197 = vpow.pop %v196
  %v198 = vadd.f32 %v195, 1.0
  %v199 = vadd.f32 %v197, 1.0
  %v200 = vrcp.pop %v198
  %v201 = vmul.f32 %v198, %v200
  %v202 = vsub.f32 1.0, %v201
  %v203 = vmul.f32 %v200, %v202
  %v204 = vadd.f32 %v200, %v203
  %vm205 = vweird.f32 %v198
  %vm206 = vweird.f32 %v200
  %vm207 = vmor %vm205, %vm206
  %v208 = vsel %vm207, %v200, %v204
  %v209 = vand.u32 2147483647, %v198
  %vm210 = vcmp.eq.f32.partialorder %v209, 8.507059e+37
  %v211 = vand.u32 %v198, 2147483648
  %v212 = vor.u32 1.1754944e-38, %v211
  %v213 = vsel %vm210, %v212, %v208
  %v214 = vmul.f32 1.0, %v213
  %v215 = vrcp.pop %v199
  %v216 = vmul.f32 %v199, %v215
  %v217 = vsub.f32 1.0, %v216
  %v218 = vmul.f32 %v215, %v217
  %v219 = vadd.f32 %v215, %v218
  %vm220 = vweird.f32 %v199
  %vm221 = vweird.f32 %v215
  %vm222 = vmor %vm220, %vm221
  %v223 = vsel %vm222, %v215, %v219
  %v224 = vand.u32 2147483647, %v199
  %vm225 = vcmp.eq.f32.partialorder %v224, 8.507059e+37
  %v226 = vand.u32 %v199, 2147483648
  %v227 = vor.u32 1.1754944e-38, %v226
  %v228 = vsel %vm225, %v227, %v223
  %v229 = vmul.f32 1.0, %v228
  %v230 = vtanh.pop %v190
  %v231 = vtanh.pop %v191
  %v232 = vmul.f32 %v214, %v132
  %v233 = vmul.f32 %v229, %v133
  %236 = vrot.lane.b32.xlu0 %v230, 64
  %v237 = vpop.permute.xlu0 %236
  %238 = vrot.lane.b32.xlu0 %v231, 64
  %v239 = vpop.permute.xlu0 %238
  %v242 = vmul.f32 %v214, %v237
  %v243 = vmul.f32 %v229, %v239
  %246 = vrot.lane.b32.xlu0 %v242, 32
  %v247 = vpop.permute.xlu0 %246
  %248 = vrot.lane.b32.xlu0 %v243, 32
  %v249 = vpop.permute.xlu0 %248
  %v252 = vadd.f32 %v232, %v247
  %v253 = vadd.f32 %v233, %v249
  %v254 = vtanh.pop %v252
  %v255 = vtanh.pop %v253
  %258 = vrot.lane.b32.xlu0 %v254, 64
  %v259 = vpop.permute.xlu0 %258
  %260 = vrot.lane.b32.xlu0 %v255, 64
  %v261 = vpop.permute.xlu0 %260
  %v264 = vmul.f32 %v214, %v259
  %v265 = vmul.f32 %v229, %v261
  %268 = vrot.lane.b32.xlu0 %v264, 32
  %v269 = vpop.permute.xlu0 %268
  %270 = vrot.lane.b32.xlu0 %v265, 32
  %v271 = vpop.permute.xlu0 %270
  %274 = vst.msk [vmem:[%s4 + $0x1] sm:$0x1] %vm154, %v269
  %275 = vst.msk [vmem:[%s4 + $0x9] sm:$0x1] %vm154, %v271
  %v276 = vld [vmem:[%s0 + $0x2] sm:$0x1]
  %v277 = vld [vmem:[%s0 + $0xa] sm:$0x1]
  %v278 = vrot.slane %v265, 7
  %v279 = vsel %vm160, %v278, %v264
  %280 = vrot.lane.b32.xlu0 %v279, 32
  %v281 = vpop.permute.xlu0 %280
  %v282 = vsel %vm34, %v281, 0
  %284 = vmatpush.msra.mxu0 0.0
  %285 = vmatpush.msra.mxu0 0.0
  %286 = vmatpush.msra.mxu0 0.0
  %287 = vmatpush.msra.mxu0 0.0
  %288 = vmatpush.msra.mxu0 0.0
  %289 = vmatpush.msra.mxu0 0.0
  %290 = vmatpush.msra.mxu0 0.0
  %291 = vmatpush.msra.mxu0 0.0
  %292 = vmatpush.msra.mxu0 0.0
  %293 = vmatpush.msra.mxu0 0.0
  %294 = vmatpush.msra.mxu0 0.0
  %295 = vmatpush.msra.mxu0 0.0
  %296 = vmatpush.msra.mxu0 %v31
  %297 = vmatpush.msra.mxu0 %v30
  %298 = vmatpush.msra.mxu0 %v29
  %299 = vmatpush.msra.mxu0 %v28
  %300 = vmatmul.f32.gmra.mxu0 %v282
  %v301 = vpop.f32.mrf.mxu0
  %v302 = vadd.f32 0.0, %v301
  %303 = vdwg.mxu0
  %v305 = vrot.slane %v302, 1
  %v308 = vadd.f32 %v276, %v302
  %v309 = vadd.f32 %v277, %v305
  %v310 = vxor.u32 %v308, 2147483648
  %v311 = vxor.u32 %v309, 2147483648
  %v312 = vmul.f32 %v310, 1.442695
  %v313 = vpow.pop %v312
  %v314 = vmul.f32 %v311, 1.442695
  %v315 = vpow.pop %v314
  %v316 = vadd.f32 %v313, 1.0
  %v317 = vadd.f32 %v315, 1.0
  %v318 = vrcp.pop %v316
  %v319 = vmul.f32 %v316, %v318
  %v320 = vsub.f32 1.0, %v319
  %v321 = vmul.f32 %v318, %v320
  %v322 = vadd.f32 %v318, %v321
  %vm323 = vweird.f32 %v316
  %vm324 = vweird.f32 %v318
  %vm325 = vmor %vm323, %vm324
  %v326 = vsel %vm325, %v318, %v322
  %v327 = vand.u32 2147483647, %v316
  %vm328 = vcmp.eq.f32.partialorder %v327, 8.507059e+37
  %v329 = vand.u32 %v316, 2147483648
  %v330 = vor.u32 1.1754944e-38, %v329
  %v331 = vsel %vm328, %v330, %v326
  %v332 = vmul.f32 1.0, %v331
  %v333 = vrcp.pop %v317
  %v334 = vmul.f32 %v317, %v333
  %v335 = vsub.f32 1.0, %v334
  %v336 = vmul.f32 %v333, %v335
  %v337 = vadd.f32 %v333, %v336
  %vm338 = vweird.f32 %v317
  %vm339 = vweird.f32 %v333
  %vm340 = vmor %vm338, %vm339
  %v341 = vsel %vm340, %v333, %v337
  %v342 = vand.u32 2147483647, %v317
  %vm343 = vcmp.eq.f32.partialorder %v342, 8.507059e+37
  %v344 = vand.u32 %v317, 2147483648
  %v345 = vor.u32 1.1754944e-38, %v344
  %v346 = vsel %vm343, %v345, %v341
  %v347 = vmul.f32 1.0, %v346
  %v348 = vtanh.pop %v308
  %v349 = vtanh.pop %v309
  %v350 = vmul.f32 %v332, %v252
  %v351 = vmul.f32 %v347, %v253
  %354 = vrot.lane.b32.xlu0 %v348, 64
  %v355 = vpop.permute.xlu0 %354
  %356 = vrot.lane.b32.xlu0 %v349, 64
  %v357 = vpop.permute.xlu0 %356
  %v360 = vmul.f32 %v332, %v355
  %v361 = vmul.f32 %v347, %v357
  %364 = vrot.lane.b32.xlu0 %v360, 32
  %v365 = vpop.permute.xlu0 %364
  %366 = vrot.lane.b32.xlu0 %v361, 32
  %v367 = vpop.permute.xlu0 %366
  %v370 = vadd.f32 %v350, %v365
  %v371 = vadd.f32 %v351, %v367
  %v372 = vtanh.pop %v370
  %v373 = vtanh.pop %v371
  %376 = vrot.lane.b32.xlu0 %v372, 64
  %v377 = vpop.permute.xlu0 %376
  %378 = vrot.lane.b32.xlu0 %v373, 64
  %v379 = vpop.permute.xlu0 %378
  %v382 = vmul.f32 %v332, %v377
  %v383 = vmul.f32 %v347, %v379
  %386 = vrot.lane.b32.xlu0 %v382, 32
  %v387 = vpop.permute.xlu0 %386
  %388 = vrot.lane.b32.xlu0 %v383, 32
  %v389 = vpop.permute.xlu0 %388
  %392 = vst.msk [vmem:[%s4 + $0x2] sm:$0x1] %vm154, %v387
  %393 = vst.msk [vmem:[%s4 + $0xa] sm:$0x1] %vm154, %v389
  %v394 = vld [vmem:[%s0 + $0x3] sm:$0x1]
  %v395 = vld [vmem:[%s0 + $0xb] sm:$0x1]
  %v396 = vrot.slane %v383, 7
  %v397 = vsel %vm160, %v396, %v382
  %398 = vrot.lane.b32.xlu0 %v397, 32
  %v399 = vpop.permute.xlu0 %398
  %v400 = vsel %vm34, %v399, 0
  %402 = vmatpush.msra.mxu0 0.0
  %403 = vmatpush.msra.mxu0 0.0
  %404 = vmatpush.msra.mxu0 0.0
  %405 = vmatpush.msra.mxu0 0.0
  %406 = vmatpush.msra.mxu0 0.0
  %407 = vmatpush.msra.mxu0 0.0
  %408 = vmatpush.msra.mxu0 0.0
  %409 = vmatpush.msra.mxu0 0.0
  %410 = vmatpush.msra.mxu0 0.0
  %411 = vmatpush.msra.mxu0 0.0
  %412 = vmatpush.msra.mxu0 0.0
  %413 = vmatpush.msra.mxu0 0.0
  %414 = vmatpush.msra.mxu0 %v31
  %415 = vmatpush.msra.mxu0 %v30
  %416 = vmatpush.msra.mxu0 %v29
  %417 = vmatpush.msra.mxu0 %v28
  %418 = vmatmul.f32.gmra.mxu0 %v400
  %v419 = vpop.f32.mrf.mxu0
  %v420 = vadd.f32 0.0, %v419
  %421 = vdwg.mxu0
  %v423 = vrot.slane %v420, 1
  %v426 = vadd.f32 %v394, %v420
  %v427 = vadd.f32 %v395, %v423
  %v428 = vxor.u32 %v426, 2147483648
  %v429 = vxor.u32 %v427, 2147483648
  %v430 = vmul.f32 %v428, 1.442695
  %v431 = vpow.pop %v430
  %v432 = vmul.f32 %v429, 1.442695
  %v433 = vpow.pop %v432
  %v434 = vadd.f32 %v431, 1.0
  %v435 = vadd.f32 %v433, 1.0
  %v436 = vrcp.pop %v434
  %v437 = vmul.f32 %v434, %v436
  %v438 = vsub.f32 1.0, %v437
  %v439 = vmul.f32 %v436, %v438
  %v440 = vadd.f32 %v436, %v439
  %vm441 = vweird.f32 %v434
  %vm442 = vweird.f32 %v436
  %vm443 = vmor %vm441, %vm442
  %v444 = vsel %vm443, %v436, %v440
  %v445 = vand.u32 2147483647, %v434
  %vm446 = vcmp.eq.f32.partialorder %v445, 8.507059e+37
  %v447 = vand.u32 %v434, 2147483648
  %v448 = vor.u32 1.1754944e-38, %v447
  %v449 = vsel %vm446, %v448, %v444
  %v450 = vmul.f32 1.0, %v449
  %v451 = vrcp.pop %v435
  %v452 = vmul.f32 %v435, %v451
  %v453 = vsub.f32 1.0, %v452
  %v454 = vmul.f32 %v451, %v453
  %v455 = vadd.f32 %v451, %v454
  %vm456 = vweird.f32 %v435
  %vm457 = vweird.f32 %v451
  %vm458 = vmor %vm456, %vm457
  %v459 = vsel %vm458, %v451, %v455
  %v460 = vand.u32 2147483647, %v435
  %vm461 = vcmp.eq.f32.partialorder %v460, 8.507059e+37
  %v462 = vand.u32 %v435, 2147483648
  %v463 = vor.u32 1.1754944e-38, %v462
  %v464 = vsel %vm461, %v463, %v459
  %v465 = vmul.f32 1.0, %v464
  %v466 = vtanh.pop %v426
  %v467 = vtanh.pop %v427
  %v468 = vmul.f32 %v450, %v370
  %v469 = vmul.f32 %v465, %v371
  %472 = vrot.lane.b32.xlu0 %v466, 64
  %v473 = vpop.permute.xlu0 %472
  %474 = vrot.lane.b32.xlu0 %v467, 64
  %v475 = vpop.permute.xlu0 %474
  %v478 = vmul.f32 %v450, %v473
  %v479 = vmul.f32 %v465, %v475
  %482 = vrot.lane.b32.xlu0 %v478, 32
  %v483 = vpop.permute.xlu0 %482
  %484 = vrot.lane.b32.xlu0 %v479, 32
  %v485 = vpop.permute.xlu0 %484
  %v488 = vadd.f32 %v468, %v483
  %v489 = vadd.f32 %v469, %v485
  %v490 = vtanh.pop %v488
  %v491 = vtanh.pop %v489
  %494 = vrot.lane.b32.xlu0 %v490, 64
  %v495 = vpop.permute.xlu0 %494
  %496 = vrot.lane.b32.xlu0 %v491, 64
  %v497 = vpop.permute.xlu0 %496
  %v500 = vmul.f32 %v450, %v495
  %v501 = vmul.f32 %v465, %v497
  %504 = vrot.lane.b32.xlu0 %v500, 32
  %v505 = vpop.permute.xlu0 %504
  %506 = vrot.lane.b32.xlu0 %v501, 32
  %v507 = vpop.permute.xlu0 %506
  %510 = vst.msk [vmem:[%s4 + $0x3] sm:$0x1] %vm154, %v505
  %511 = vst.msk [vmem:[%s4 + $0xb] sm:$0x1] %vm154, %v507
  %v512 = vld [vmem:[%s0 + $0x4] sm:$0x1]
  %v513 = vld [vmem:[%s0 + $0xc] sm:$0x1]
  %v514 = vrot.slane %v501, 7
  %v515 = vsel %vm160, %v514, %v500
  %516 = vrot.lane.b32.xlu0 %v515, 32
  %v517 = vpop.permute.xlu0 %516
  %v518 = vsel %vm34, %v517, 0
  %520 = vmatpush.msra.mxu0 0.0
  %521 = vmatpush.msra.mxu0 0.0
  %522 = vmatpush.msra.mxu0 0.0
  %523 = vmatpush.msra.mxu0 0.0
  %524 = vmatpush.msra.mxu0 0.0
  %525 = vmatpush.msra.mxu0 0.0
  %526 = vmatpush.msra.mxu0 0.0
  %527 = vmatpush.msra.mxu0 0.0
  %528 = vmatpush.msra.mxu0 0.0
  %529 = vmatpush.msra.mxu0 0.0
  %530 = vmatpush.msra.mxu0 0.0
  %531 = vmatpush.msra.mxu0 0.0
  %532 = vmatpush.msra.mxu0 %v31
  %533 = vmatpush.msra.mxu0 %v30
  %534 = vmatpush.msra.mxu0 %v29
  %535 = vmatpush.msra.mxu0 %v28
  %536 = vmatmul.f32.gmra.mxu0 %v518
  %v537 = vpop.f32.mrf.mxu0
  %v538 = vadd.f32 0.0, %v537
  %539 = vdwg.mxu0
  %v541 = vrot.slane %v538, 1
  %v544 = vadd.f32 %v512, %v538
  %v545 = vadd.f32 %v513, %v541
  %v546 = vxor.u32 %v544, 2147483648
  %v547 = vxor.u32 %v545, 2147483648
  %v548 = vmul.f32 %v546, 1.442695
  %v549 = vpow.pop %v548
  %v550 = vmul.f32 %v547, 1.442695
  %v551 = vpow.pop %v550
  %v552 = vadd.f32 %v549, 1.0
  %v553 = vadd.f32 %v551, 1.0
  %v554 = vrcp.pop %v552
  %v555 = vmul.f32 %v552, %v554
  %v556 = vsub.f32 1.0, %v555
  %v557 = vmul.f32 %v554, %v556
  %v558 = vadd.f32 %v554, %v557
  %vm559 = vweird.f32 %v552
  %vm560 = vweird.f32 %v554
  %vm561 = vmor %vm559, %vm560
  %v562 = vsel %vm561, %v554, %v558
  %v563 = vand.u32 2147483647, %v552
  %vm564 = vcmp.eq.f32.partialorder %v563, 8.507059e+37
  %v565 = vand.u32 %v552, 2147483648
  %v566 = vor.u32 1.1754944e-38, %v565
  %v567 = vsel %vm564, %v566, %v562
  %v568 = vmul.f32 1.0, %v567
  %v569 = vrcp.pop %v553
  %v570 = vmul.f32 %v553, %v569
  %v571 = vsub.f32 1.0, %v570
  %v572 = vmul.f32 %v569, %v571
  %v573 = vadd.f32 %v569, %v572
  %vm574 = vweird.f32 %v553
  %vm575 = vweird.f32 %v569
  %vm576 = vmor %vm574, %vm575
  %v577 = vsel %vm576, %v569, %v573
  %v578 = vand.u32 2147483647, %v553
  %vm579 = vcmp.eq.f32.partialorder %v578, 8.507059e+37
  %v580 = vand.u32 %v553, 2147483648
  %v581 = vor.u32 1.1754944e-38, %v580
  %v582 = vsel %vm579, %v581, %v577
  %v583 = vmul.f32 1.0, %v582
  %v584 = vtanh.pop %v544
  %v585 = vtanh.pop %v545
  %v586 = vmul.f32 %v568, %v488
  %v587 = vmul.f32 %v583, %v489
  %590 = vrot.lane.b32.xlu0 %v584, 64
  %v591 = vpop.permute.xlu0 %590
  %592 = vrot.lane.b32.xlu0 %v585, 64
  %v593 = vpop.permute.xlu0 %592
  %v596 = vmul.f32 %v568, %v591
  %v597 = vmul.f32 %v583, %v593
  %600 = vrot.lane.b32.xlu0 %v596, 32
  %v601 = vpop.permute.xlu0 %600
  %602 = vrot.lane.b32.xlu0 %v597, 32
  %v603 = vpop.permute.xlu0 %602
  %v606 = vadd.f32 %v586, %v601
  %v607 = vadd.f32 %v587, %v603
  %v608 = vtanh.pop %v606
  %v609 = vtanh.pop %v607
  %612 = vrot.lane.b32.xlu0 %v608, 64
  %v613 = vpop.permute.xlu0 %612
  %614 = vrot.lane.b32.xlu0 %v609, 64
  %v615 = vpop.permute.xlu0 %614
  %v618 = vmul.f32 %v568, %v613
  %v619 = vmul.f32 %v583, %v615
  %622 = vrot.lane.b32.xlu0 %v618, 32
  %v623 = vpop.permute.xlu0 %622
  %624 = vrot.lane.b32.xlu0 %v619, 32
  %v625 = vpop.permute.xlu0 %624
  %628 = vst.msk [vmem:[%s4 + $0x4] sm:$0x1] %vm154, %v623
  %629 = vst.msk [vmem:[%s4 + $0xc] sm:$0x1] %vm154, %v625
  %v630 = vld [vmem:[%s0 + $0x5] sm:$0x1]
  %v631 = vld [vmem:[%s0 + $0xd] sm:$0x1]
  %v632 = vrot.slane %v619, 7
  %v633 = vsel %vm160, %v632, %v618
  %634 = vrot.lane.b32.xlu0 %v633, 32
  %v635 = vpop.permute.xlu0 %634
  %v636 = vsel %vm34, %v635, 0
  %638 = vmatpush.msra.mxu0 0.0
  %639 = vmatpush.msra.mxu0 0.0
  %640 = vmatpush.msra.mxu0 0.0
  %641 = vmatpush.msra.mxu0 0.0
  %642 = vmatpush.msra.mxu0 0.0
  %643 = vmatpush.msra.mxu0 0.0
  %644 = vmatpush.msra.mxu0 0.0
  %645 = vmatpush.msra.mxu0 0.0
  %646 = vmatpush.msra.mxu0 0.0
  %647 = vmatpush.msra.mxu0 0.0
  %648 = vmatpush.msra.mxu0 0.0
  %649 = vmatpush.msra.mxu0 0.0
  %650 = vmatpush.msra.mxu0 %v31
  %651 = vmatpush.msra.mxu0 %v30
  %652 = vmatpush.msra.mxu0 %v29
  %653 = vmatpush.msra.mxu0 %v28
  %654 = vmatmul.f32.gmra.mxu0 %v636
  %v655 = vpop.f32.mrf.mxu0
  %v656 = vadd.f32 0.0, %v655
  %657 = vdwg.mxu0
  %v659 = vrot.slane %v656, 1
  %v662 = vadd.f32 %v630, %v656
  %v663 = vadd.f32 %v631, %v659
  %v664 = vxor.u32 %v662, 2147483648
  %v665 = vxor.u32 %v663, 2147483648
  %v666 = vmul.f32 %v664, 1.442695
  %v667 = vpow.pop %v666
  %v668 = vmul.f32 %v665, 1.442695
  %v669 = vpow.pop %v668
  %v670 = vadd.f32 %v667, 1.0
  %v671 = vadd.f32 %v669, 1.0
  %v672 = vrcp.pop %v670
  %v673 = vmul.f32 %v670, %v672
  %v674 = vsub.f32 1.0, %v673
  %v675 = vmul.f32 %v672, %v674
  %v676 = vadd.f32 %v672, %v675
  %vm677 = vweird.f32 %v670
  %vm678 = vweird.f32 %v672
  %vm679 = vmor %vm677, %vm678
  %v680 = vsel %vm679, %v672, %v676
  %v681 = vand.u32 2147483647, %v670
  %vm682 = vcmp.eq.f32.partialorder %v681, 8.507059e+37
  %v683 = vand.u32 %v670, 2147483648
  %v684 = vor.u32 1.1754944e-38, %v683
  %v685 = vsel %vm682, %v684, %v680
  %v686 = vmul.f32 1.0, %v685
  %v687 = vrcp.pop %v671
  %v688 = vmul.f32 %v671, %v687
  %v689 = vsub.f32 1.0, %v688
  %v690 = vmul.f32 %v687, %v689
  %v691 = vadd.f32 %v687, %v690
  %vm692 = vweird.f32 %v671
  %vm693 = vweird.f32 %v687
  %vm694 = vmor %vm692, %vm693
  %v695 = vsel %vm694, %v687, %v691
  %v696 = vand.u32 2147483647, %v671
  %vm697 = vcmp.eq.f32.partialorder %v696, 8.507059e+37
  %v698 = vand.u32 %v671, 2147483648
  %v699 = vor.u32 1.1754944e-38, %v698
  %v700 = vsel %vm697, %v699, %v695
  %v701 = vmul.f32 1.0, %v700
  %v702 = vtanh.pop %v662
  %v703 = vtanh.pop %v663
  %v704 = vmul.f32 %v686, %v606
  %v705 = vmul.f32 %v701, %v607
  %708 = vrot.lane.b32.xlu0 %v702, 64
  %v709 = vpop.permute.xlu0 %708
  %710 = vrot.lane.b32.xlu0 %v703, 64
  %v711 = vpop.permute.xlu0 %710
  %v714 = vmul.f32 %v686, %v709
  %v715 = vmul.f32 %v701, %v711
  %718 = vrot.lane.b32.xlu0 %v714, 32
  %v719 = vpop.permute.xlu0 %718
  %720 = vrot.lane.b32.xlu0 %v715, 32
  %v721 = vpop.permute.xlu0 %720
  %v724 = vadd.f32 %v704, %v719
  %v725 = vadd.f32 %v705, %v721
  %v726 = vtanh.pop %v724
  %v727 = vtanh.pop %v725
  %730 = vrot.lane.b32.xlu0 %v726, 64
  %v731 = vpop.permute.xlu0 %730
  %732 = vrot.lane.b32.xlu0 %v727, 64
  %v733 = vpop.permute.xlu0 %732
  %v736 = vmul.f32 %v686, %v731
  %v737 = vmul.f32 %v701, %v733
  %740 = vrot.lane.b32.xlu0 %v736, 32
  %v741 = vpop.permute.xlu0 %740
  %742 = vrot.lane.b32.xlu0 %v737, 32
  %v743 = vpop.permute.xlu0 %742
  %746 = vst.msk [vmem:[%s4 + $0x5] sm:$0x1] %vm154, %v741
  %747 = vst.msk [vmem:[%s4 + $0xd] sm:$0x1] %vm154, %v743
  %v748 = vld [vmem:[%s0 + $0x6] sm:$0x1]
  %v749 = vld [vmem:[%s0 + $0xe] sm:$0x1]
  %v750 = vrot.slane %v737, 7
  %v751 = vsel %vm160, %v750, %v736
  %752 = vrot.lane.b32.xlu0 %v751, 32
  %v753 = vpop.permute.xlu0 %752
  %v754 = vsel %vm34, %v753, 0
  %756 = vmatpush.msra.mxu0 0.0
  %757 = vmatpush.msra.mxu0 0.0
  %758 = vmatpush.msra.mxu0 0.0
  %759 = vmatpush.msra.mxu0 0.0
  %760 = vmatpush.msra.mxu0 0.0
  %761 = vmatpush.msra.mxu0 0.0
  %762 = vmatpush.msra.mxu0 0.0
  %763 = vmatpush.msra.mxu0 0.0
  %764 = vmatpush.msra.mxu0 0.0
  %765 = vmatpush.msra.mxu0 0.0
  %766 = vmatpush.msra.mxu0 0.0
  %767 = vmatpush.msra.mxu0 0.0
  %768 = vmatpush.msra.mxu0 %v31
  %769 = vmatpush.msra.mxu0 %v30
  %770 = vmatpush.msra.mxu0 %v29
  %771 = vmatpush.msra.mxu0 %v28
  %772 = vmatmul.f32.gmra.mxu0 %v754
  %v773 = vpop.f32.mrf.mxu0
  %v774 = vadd.f32 0.0, %v773
  %775 = vdwg.mxu0
  %v777 = vrot.slane %v774, 1
  %v780 = vadd.f32 %v748, %v774
  %v781 = vadd.f32 %v749, %v777
  %v782 = vxor.u32 %v780, 2147483648
  %v783 = vxor.u32 %v781, 2147483648
  %v784 = vmul.f32 %v782, 1.442695
  %v785 = vpow.pop %v784
  %v786 = vmul.f32 %v783, 1.442695
  %v787 = vpow.pop %v786
  %v788 = vadd.f32 %v785, 1.0
  %v789 = vadd.f32 %v787, 1.0
  %v790 = vrcp.pop %v788
  %v791 = vmul.f32 %v788, %v790
  %v792 = vsub.f32 1.0, %v791
  %v793 = vmul.f32 %v790, %v792
  %v794 = vadd.f32 %v790, %v793
  %vm795 = vweird.f32 %v788
  %vm796 = vweird.f32 %v790
  %vm797 = vmor %vm795, %vm796
  %v798 = vsel %vm797, %v790, %v794
  %v799 = vand.u32 2147483647, %v788
  %vm800 = vcmp.eq.f32.partialorder %v799, 8.507059e+37
  %v801 = vand.u32 %v788, 2147483648
  %v802 = vor.u32 1.1754944e-38, %v801
  %v803 = vsel %vm800, %v802, %v798
  %v804 = vmul.f32 1.0, %v803
  %v805 = vrcp.pop %v789
  %v806 = vmul.f32 %v789, %v805
  %v807 = vsub.f32 1.0, %v806
  %v808 = vmul.f32 %v805, %v807
  %v809 = vadd.f32 %v805, %v808
  %vm810 = vweird.f32 %v789
  %vm811 = vweird.f32 %v805
  %vm812 = vmor %vm810, %vm811
  %v813 = vsel %vm812, %v805, %v809
  %v814 = vand.u32 2147483647, %v789
  %vm815 = vcmp.eq.f32.partialorder %v814, 8.507059e+37
  %v816 = vand.u32 %v789, 2147483648
  %v817 = vor.u32 1.1754944e-38, %v816
  %v818 = vsel %vm815, %v817, %v813
  %v819 = vmul.f32 1.0, %v818
  %v820 = vtanh.pop %v780
  %v821 = vtanh.pop %v781
  %v822 = vmul.f32 %v804, %v724
  %v823 = vmul.f32 %v819, %v725
  %826 = vrot.lane.b32.xlu0 %v820, 64
  %v827 = vpop.permute.xlu0 %826
  %828 = vrot.lane.b32.xlu0 %v821, 64
  %v829 = vpop.permute.xlu0 %828
  %v832 = vmul.f32 %v804, %v827
  %v833 = vmul.f32 %v819, %v829
  %836 = vrot.lane.b32.xlu0 %v832, 32
  %v837 = vpop.permute.xlu0 %836
  %838 = vrot.lane.b32.xlu0 %v833, 32
  %v839 = vpop.permute.xlu0 %838
  %v842 = vadd.f32 %v822, %v837
  %v843 = vadd.f32 %v823, %v839
  %v844 = vtanh.pop %v842
  %v845 = vtanh.pop %v843
  %848 = vrot.lane.b32.xlu0 %v844, 64
  %v849 = vpop.permute.xlu0 %848
  %850 = vrot.lane.b32.xlu0 %v845, 64
  %v851 = vpop.permute.xlu0 %850
  %v854 = vmul.f32 %v804, %v849
  %v855 = vmul.f32 %v819, %v851
  %858 = vrot.lane.b32.xlu0 %v854, 32
  %v859 = vpop.permute.xlu0 %858
  %860 = vrot.lane.b32.xlu0 %v855, 32
  %v861 = vpop.permute.xlu0 %860
  %864 = vst.msk [vmem:[%s4 + $0x6] sm:$0x1] %vm154, %v859
  %865 = vst.msk [vmem:[%s4 + $0xe] sm:$0x1] %vm154, %v861
  %v866 = vld [vmem:[%s0 + $0x7] sm:$0x1]
  %v867 = vld [vmem:[%s0 + $0xf] sm:$0x1]
  %v868 = vrot.slane %v855, 7
  %v869 = vsel %vm160, %v868, %v854
  %870 = vrot.lane.b32.xlu0 %v869, 32
  %v871 = vpop.permute.xlu0 %870
  %v872 = vsel %vm34, %v871, 0
  %874 = vmatpush.msra.mxu0 0.0
  %875 = vmatpush.msra.mxu0 0.0
  %876 = vmatpush.msra.mxu0 0.0
  %877 = vmatpush.msra.mxu0 0.0
  %878 = vmatpush.msra.mxu0 0.0
  %879 = vmatpush.msra.mxu0 0.0
  %880 = vmatpush.msra.mxu0 0.0
  %881 = vmatpush.msra.mxu0 0.0
  %882 = vmatpush.msra.mxu0 0.0
  %883 = vmatpush.msra.mxu0 0.0
  %884 = vmatpush.msra.mxu0 0.0
  %885 = vmatpush.msra.mxu0 0.0
  %886 = vmatpush.msra.mxu0 %v31
  %887 = vmatpush.msra.mxu0 %v30
  %888 = vmatpush.msra.mxu0 %v29
  %889 = vmatpush.msra.mxu0 %v28
  %890 = vmatmul.f32.gmra.mxu0 %v872
  %v891 = vpop.f32.mrf.mxu0
  %v892 = vadd.f32 0.0, %v891
  %893 = vdwg.mxu0
  %v895 = vrot.slane %v892, 1
  %v898 = vadd.f32 %v866, %v892
  %v899 = vadd.f32 %v867, %v895
  %v900 = vxor.u32 %v898, 2147483648
  %v901 = vxor.u32 %v899, 2147483648
  %v902 = vmul.f32 %v900, 1.442695
  %v903 = vpow.pop %v902
  %v904 = vmul.f32 %v901, 1.442695
  %v905 = vpow.pop %v904
  %v906 = vadd.f32 %v903, 1.0
  %v907 = vadd.f32 %v905, 1.0
  %v908 = vrcp.pop %v906
  %v909 = vmul.f32 %v906, %v908
  %v910 = vsub.f32 1.0, %v909
  %v911 = vmul.f32 %v908, %v910
  %v912 = vadd.f32 %v908, %v911
  %vm913 = vweird.f32 %v906
  %vm914 = vweird.f32 %v908
  %vm915 = vmor %vm913, %vm914
  %v916 = vsel %vm915, %v908, %v912
  %v917 = vand.u32 2147483647, %v906
  %vm918 = vcmp.eq.f32.partialorder %v917, 8.507059e+37
  %v919 = vand.u32 %v906, 2147483648
  %v920 = vor.u32 1.1754944e-38, %v919
  %v921 = vsel %vm918, %v920, %v916
  %v922 = vmul.f32 1.0, %v921
  %v923 = vrcp.pop %v907
  %v924 = vmul.f32 %v907, %v923
  %v925 = vsub.f32 1.0, %v924
  %v926 = vmul.f32 %v923, %v925
  %v927 = vadd.f32 %v923, %v926
  %vm928 = vweird.f32 %v907
  %vm929 = vweird.f32 %v923
  %vm930 = vmor %vm928, %vm929
  %v931 = vsel %vm930, %v923, %v927
  %v932 = vand.u32 2147483647, %v907
  %vm933 = vcmp.eq.f32.partialorder %v932, 8.507059e+37
  %v934 = vand.u32 %v907, 2147483648
  %v935 = vor.u32 1.1754944e-38, %v934
  %v936 = vsel %vm933, %v935, %v931
  %v937 = vmul.f32 1.0, %v936
  %v938 = vtanh.pop %v898
  %v939 = vtanh.pop %v899
  %v940 = vmul.f32 %v922, %v842
  %v941 = vmul.f32 %v937, %v843
  %944 = vrot.lane.b32.xlu0 %v938, 64
  %v945 = vpop.permute.xlu0 %944
  %946 = vrot.lane.b32.xlu0 %v939, 64
  %v947 = vpop.permute.xlu0 %946
  %v950 = vmul.f32 %v922, %v945
  %v951 = vmul.f32 %v937, %v947
  %954 = vrot.lane.b32.xlu0 %v950, 32
  %v955 = vpop.permute.xlu0 %954
  %956 = vrot.lane.b32.xlu0 %v951, 32
  %v957 = vpop.permute.xlu0 %956
  %v960 = vadd.f32 %v940, %v955
  %v961 = vadd.f32 %v941, %v957
  %v962 = vtanh.pop %v960
  %v963 = vtanh.pop %v961
  %966 = vrot.lane.b32.xlu0 %v962, 64
  %v967 = vpop.permute.xlu0 %966
  %968 = vrot.lane.b32.xlu0 %v963, 64
  %v969 = vpop.permute.xlu0 %968
  %v972 = vmul.f32 %v922, %v967
  %v973 = vmul.f32 %v937, %v969
  %976 = vrot.lane.b32.xlu0 %v972, 32
  %v977 = vpop.permute.xlu0 %976
  %978 = vrot.lane.b32.xlu0 %v973, 32
  %v979 = vpop.permute.xlu0 %978
  %982 = vst.msk [vmem:[%s4 + $0x7] sm:$0x1] %vm154, %v977
  %983 = vst.msk [vmem:[%s4 + $0xf] sm:$0x1] %vm154, %v979
  %v984 = vrot.slane %v973, 7
  %v985 = vsel %vm160, %v984, %v972
  %986 = vrot.lane.b32.xlu0 %v985, 32
  %v987 = vpop.permute.xlu0 %986
  %vm989 = vcmask 254976
  %990 = vst.msk [vmem:[#allocation2] sm:$0x3] %vm989, %v987
  %v993 = vrot.slane %v961, 7
  %v994 = vsel %vm160, %v993, %v960
  %995 = vrot.lane.b32.xlu0 %v994, 96
  %v996 = vpop.permute.xlu0 %995
  %998 = vst.msk [vmem:[#allocation3] sm:$0x3] %vm989, %v996
  // Predicated region
  $region22: #{lstm_model_forward.4} parent=0 // pred_check
    _
  $region23: #{lstm_model_forward.4} parent=0 // pred_check_branch
    %1000 = sbr.rel (0) target = $region25
  $region24: #{lstm_model_forward.4} parent=0 // pred_region
    _
  $region25: #{lstm_model_forward.4} parent=0 // pred_fallthru
    _
  // Predicated region
  $region26: #{lstm_model_forward.4} parent=0 // pred_check
    _
  $region27: #{lstm_model_forward.4} parent=0 // pred_check_branch
    %1002 = sbr.rel (0) target = $region29
  $region28: #{lstm_model_forward.4} parent=0 // pred_region
    _
  $region29: #{lstm_model_forward.4} parent=0 // pred_fallthru
    _

</llo_original>
